<compile_context>
chip_gen: v5e
topology: v5e:2x2
jax: 0.10.0
libtpu: 0.0.40
codegen_flags: <defaults>
</compile_context>

<pallas_src>
import functools
import math

import jax
import jax.numpy as jnp
from jax.experimental import pallas as pl
from jax.experimental.pallas import tpu as pltpu

LN_EPS = 1e-5
NEG_BIG = -1e30  # finite "minus infinity" for the causal mask (NaN-safe)


def _round_up(x, m):
    return ((x + m - 1) // m) * m


def _vmem_cap_bytes():
    # Per-generation VMEM ceiling (v5e/v6e: 128 MiB, v7x: 64 MiB per TensorCore).
    try:
        return int(0.80 * pltpu.get_tpu_info().vmem_capacity_bytes)
    except Exception:
        return 56 * 1024 * 1024  # conservative v7x-safe default


def _vmem_limit(per_step_bytes, resident_bytes=0):
    # Streamed blocks are double-buffered; leave headroom for compiler-internal scratch.
    need = 2 * per_step_bytes + resident_bytes + (8 << 20)
    return int(min(_vmem_cap_bytes(), max(16 << 20, need)))


def _layernorm(h, w, b):
    mu = jnp.mean(h, axis=-1, keepdims=True)
    var = jnp.mean((h - mu) ** 2, axis=-1, keepdims=True)
    return (h - mu) * jax.lax.rsqrt(var + LN_EPS) * w + b


# ----------------------------- Kernel A: transformer block -----------------------------
def _block_kernel(n_head,
                  x_ref,
                  ln1w_ref, ln1b_ref, wqkv_ref,
                  ln2w_ref, ln2b_ref,
                  wh_ref, bh_ref, wp_ref, bp_ref,
                  lnfw_ref, lnfb_ref,
                  xf_ref, attn_scr):
    Bb, T, C = x_ref.shape
    H = n_head
    hs = C // H
    M = Bb * T
    scale = 1.0 / math.sqrt(C)  # PyTorch Head scales by 1/sqrt(n_embed)

    # ---- flatten (Bb*T) into the matmul M dim; LN math stays f32 ----
    x = x_ref[...].reshape(M, C)
    xn = _layernorm(x, ln1w_ref[...], ln1b_ref[...])

    # Fused QKV projection: one wide bf16 MXU matmul, f32 accumulation.
    qkv = jnp.dot(xn.astype(jnp.bfloat16), wqkv_ref[...],
                  preferred_element_type=jnp.float32)                   # (M, 3C)
    qkv = qkv.reshape(Bb, T, 3 * H, hs)

    row = jax.lax.broadcasted_iota(jnp.int32, (T, T), 0)
    col = jax.lax.broadcasted_iota(jnp.int32, (T, T), 1)
    causal = (row >= col)[None, :, :]                                   # (1, T, T)

    # Attention stays per-sequence (the causal mask is intra-sequence); static unroll over the
    # small batch block, one rank-3 relayout of the fused qkv slab per sequence.
    for b in range(Bb):
        hqkv = qkv[b].transpose(1, 0, 2)                                # (3H, T, hs)
        q = hqkv[0 * H:1 * H].astype(jnp.bfloat16)                      # (H, T, hs)
        k = hqkv[1 * H:2 * H].astype(jnp.bfloat16)
        v = hqkv[2 * H:3 * H].astype(jnp.bfloat16)
        s = jnp.einsum('htd,hsd->hts', q, k,
                       preferred_element_type=jnp.float32) * scale     # (H, T, T) f32
        s = jnp.where(causal, s, NEG_BIG)
        s = s - jnp.max(s, axis=-1, keepdims=True)
        p = jnp.exp(s)
        p = p * pl.reciprocal(jnp.sum(p, axis=-1, keepdims=True), approx=True)
        o = jnp.einsum('hts,hsd->htd', p.astype(jnp.bfloat16), v,
                       preferred_element_type=jnp.float32)              # (H, T, hs)
        attn_scr[b * T:(b + 1) * T, :] = o.transpose(1, 0, 2).reshape(T, C)
    # TODO(synk): for long contexts, tile the KV axis with an online (flash) softmax instead
    # of materializing the (H, T, T) scores (required to fit v7x's 64 MiB VMEM at real sizes).

    x1 = x + attn_scr[...]

    # ---- MLP (bf16 dots, f32 accumulation, ReLU in f32) ----
    xn2 = _layernorm(x1, ln2w_ref[...], ln2b_ref[...])
    hid = jnp.dot(xn2.astype(jnp.bfloat16), wh_ref[...],
                  preferred_element_type=jnp.float32) + bh_ref[...]
    hid = jnp.maximum(hid, 0.0)
    mlp = jnp.dot(hid.astype(jnp.bfloat16), wp_ref[...],
                  preferred_element_type=jnp.float32) + bp_ref[...]
    x2 = x1 + mlp

    # ---- final LayerNorm; store bf16 (dot-boundary cast for the lm_head kernel) ----
    xf = _layernorm(x2, lnfw_ref[...], lnfb_ref[...])
    xf_ref[...] = xf.astype(xf_ref.dtype).reshape(Bb, T, C)


# ----------------------------- Kernel B: vocab-tiled lm_head -----------------------------
def _lm_head_kernel(xf_ref, w_ref, b_ref, out_ref):
    out_ref[...] = (jnp.dot(xf_ref[...], w_ref[...],
                            preferred_element_type=jnp.float32) + b_ref[...])


# ----------------------------- one-time weight preparation -----------------------------
def prepare_params(params):
    """One-time weight repacking / padding / bf16 casts (hoisted out of the forward)."""
    C = params["w_h"].shape[0]
    V = params["w_lm"].shape[1]
    H = params["wq"].shape[0]

    def heads_to_cols(w):                          # (H, C, hs) -> (C, H*hs)
        return jnp.transpose(w, (1, 0, 2)).reshape(C, -1)

    w_qkv = jnp.concatenate([heads_to_cols(params["wq"]),
                             heads_to_cols(params["wk"]),
                             heads_to_cols(params["wv"])], axis=1)       # (C, 3C)

    tile_v = min(1024, _round_up(V, 128))          # lane-dense vocab tiles
    Vp = _round_up(V, tile_v)
    w_lm, b_lm = params["w_lm"], params["b_lm"]
    if Vp != V:
        w_lm = jnp.pad(w_lm, ((0, 0), (0, Vp - V)))
        b_lm = jnp.pad(b_lm, ((0, 0), (0, Vp - V)))

    prepped = dict(params)
    prepped.update(
        w_qkv=w_qkv.astype(jnp.bfloat16),
        w_h_bf16=params["w_h"].astype(jnp.bfloat16),
        w_p_bf16=params["w_p"].astype(jnp.bfloat16),
        w_lm_pad=w_lm.astype(jnp.bfloat16),
        b_lm_pad=b_lm.astype(jnp.float32),
        tile_v=tile_v,
        n_head=H,
        vocab_size=V,
    )
    return prepped


# ----------------------------------- forward pass --------------------------------------
def transformer_forward(idx, prepped):
    """Pallas-backed forward.  idx: (B, T) int32.  Returns (logits (B,T,V), None)."""
    p = prepped
    # Token/position embedding gather kept as JAX glue (data-dependent row lookup).
    tok = p["token_embed"][idx]                    # (B, T, C)
    pos = p["position_embed"][: idx.shape[1]]      # (T, C)
    x = (tok + pos).astype(jnp.float32)
    B, T, C = x.shape
    H = p["n_head"]
    V = p["vocab_size"]

    # ---- Kernel A: batch-blocked grid.  Pack several sequences per step to amortize the
    # ~0.35us per-step overhead and give the MXU M = Bblk*T rows.  (On v7x one may instead
    # prefer a Bblk that keeps the grid extent even so both TensorCores are fed.) ----
    Bblk = 1
    for cand in range(min(B, 8), 0, -1):
        if B % cand == 0:
            Bblk = cand
            break

    weights = (p["ln1_w"], p["ln1_b"], p["w_qkv"],
               p["ln2_w"], p["ln2_b"],
               p["w_h_bf16"], p["b_h"], p["w_p_bf16"], p["b_p"],
               p["lnf_w"], p["lnf_b"])

    def full_spec(arr):
        nd = arr.ndim
        return pl.BlockSpec(arr.shape, lambda g, _nd=nd: (0,) * _nd)
    # TODO(synk): pipeline_mode=pl.Buffered(1) on these grid-invariant weight specs would drop
    # their second VMEM buffer (v7x headroom) once validated on the target jax version.

    w_bytes = sum(int(w.size) * w.dtype.itemsize for w in weights)
    act_bytes = (3 * Bblk * T * C * 4          # x block, xf block, attention scratch
                 + Bblk * T * 4 * C * 4        # MLP hidden
                 + H * T * T * 4)              # per-sequence score tile
    vmem_a = _vmem_limit(act_bytes, resident_bytes=2 * w_bytes)

    xf = pl.pallas_call(
        functools.partial(_block_kernel, H),
        out_shape=jax.ShapeDtypeStruct((B, T, C), jnp.bfloat16),
        grid_spec=pltpu.PrefetchScalarGridSpec(
            num_scalar_prefetch=0,
            grid=(B // Bblk,),
            in_specs=[pl.BlockSpec((Bblk, T, C), lambda g: (g, 0, 0))]
                     + [full_spec(w) for w in weights],
            out_specs=pl.BlockSpec((Bblk, T, C), lambda g: (g, 0, 0)),
            scratch_shapes=[pltpu.VMEM((Bblk * T, C), jnp.float32)],
        ),
        compiler_params=pltpu.CompilerParams(
            dimension_semantics=("parallel",),
            vmem_limit_bytes=vmem_a),
    )(x, *weights)

    # ---- Kernel B: vocab-tiled lm_head.  M padded to a multiple of 8/128 (no giant fallback
    # block); grid ordered (vocab outer, M inner) so each (C, TILE_V) weight tile is streamed
    # from HBM once and reused across all M tiles; bf16 xf is the cheap re-streamed operand. ----
    M = B * T
    TM = 256 if M >= 256 else _round_up(M, 8)
    Mp = _round_up(M, TM)
    xf2 = xf.reshape(M, C)
    if Mp != M:
        xf2 = jnp.pad(xf2, ((0, Mp - M), (0, 0)))

    TILE_V = p["tile_v"]
    w_lm, b_lm = p["w_lm_pad"], p["b_lm_pad"]
    Vp = w_lm.shape[1]

    step_bytes_b = (TM * C * 2               # xf tile (bf16)
                    + C * TILE_V * 2         # weight tile (bf16)
                    + TILE_V * 4             # bias tile
                    + TM * TILE_V * 4)       # output tile
    vmem_b = _vmem_limit(step_bytes_b)

    logits_p = pl.pallas_call(
        _lm_head_kernel,
        out_shape=jax.ShapeDtypeStruct((Mp, Vp), jnp.float32),
        grid_spec=pltpu.PrefetchScalarGridSpec(
            num_scalar_prefetch=0,
            grid=(Vp // TILE_V, Mp // TM),
            in_specs=[pl.BlockSpec((TM, C), lambda j, i: (i, 0)),
                      pl.BlockSpec((C, TILE_V), lambda j, i: (0, j)),
                      pl.BlockSpec((1, TILE_V), lambda j, i: (0, j))],
            out_specs=pl.BlockSpec((TM, TILE_V), lambda j, i: (i, j)),
        ),
        compiler_params=pltpu.CompilerParams(
            dimension_semantics=("parallel", "parallel"),
            vmem_limit_bytes=vmem_b),
    )(xf2, w_lm, b_lm)

    logits = logits_p[:M, :V].reshape(B, T, V)
    return logits, None          # targets=None path of the PyTorch module -> loss is None


# ------------------------- pure-JAX reference (for validation) -------------------------
def reference_forward(idx, params):
    tok = params["token_embed"][idx]
    pos = params["position_embed"][: idx.shape[1]]
    x = (tok + pos).astype(jnp.float32)
    B, T, C = x.shape

    def ln(h, w, b):
        mu = jnp.mean(h, axis=-1, keepdims=True)
        var = jnp.mean((h - mu) ** 2, axis=-1, keepdims=True)
        return (h - mu) / jnp.sqrt(var + LN_EPS) * w + b

    xn = ln(x, params["ln1_w"], params["ln1_b"])
    scale = 1.0 / math.sqrt(C)
    mask = jnp.tril(jnp.ones((T, T), dtype=bool))
    outs = []
    for h in range(params["wk"].shape[0]):
        k = xn @ params["wk"][h]
        q = xn @ params["wq"][h]
        v = xn @ params["wv"][h]
        s = jnp.einsum("btd,bsd->bts", q, k) * scale
        s = jnp.where(mask, s, -jnp.inf)
        p = jax.nn.softmax(s, axis=-1)
        outs.append(jnp.einsum("bts,bsd->btd", p, v))
    x1 = x + jnp.concatenate(outs, axis=-1)
    xn2 = ln(x1, params["ln2_w"], params["ln2_b"])
    hid = jnp.maximum(xn2 @ params["w_h"] + params["b_h"], 0.0)
    x2 = x1 + hid @ params["w_p"] + params["b_p"]
    xf = ln(x2, params["lnf_w"], params["lnf_b"])
    return xf @ params["w_lm"] + params["b_lm"], None


def init_params(key, n_head, n_embed, context_length, vocab_size):
    hs = n_embed // n_head
    ks = jax.random.split(key, 16)
    u = lambda k, shape, fan_in: jax.random.uniform(
        k, shape, jnp.float32, -1.0 / math.sqrt(fan_in), 1.0 / math.sqrt(fan_in))
    n = lambda k, shape: jax.random.normal(k, shape, jnp.float32)
    return {
        "token_embed": n(ks[0], (vocab_size, n_embed)),
        "position_embed": n(ks[1], (context_length, n_embed)),
        "ln1_w": 1.0 + 0.1 * n(ks[2], (1, n_embed)),
        "ln1_b": 0.1 * n(ks[3], (1, n_embed)),
        "wk": u(ks[4], (n_head, n_embed, hs), n_embed),
        "wq": u(ks[5], (n_head, n_embed, hs), n_embed),
        "wv": u(ks[6], (n_head, n_embed, hs), n_embed),
        "ln2_w": 1.0 + 0.1 * n(ks[7], (1, n_embed)),
        "ln2_b": 0.1 * n(ks[8], (1, n_embed)),
        "w_h": u(ks[9], (n_embed, 4 * n_embed), n_embed),
        "b_h": u(ks[10], (1, 4 * n_embed), n_embed),
        "w_p": u(ks[11], (4 * n_embed, n_embed), 4 * n_embed),
        "b_p": u(ks[12], (1, n_embed), 4 * n_embed),
        "lnf_w": 1.0 + 0.1 * n(ks[13], (1, n_embed)),
        "lnf_b": 0.1 * n(ks[13], (1, n_embed)),
        "w_lm": u(ks[14], (n_embed, vocab_size), n_embed),
        "b_lm": u(ks[15], (1, vocab_size), n_embed),
    }


if __name__ == "__main__":
    n_head, n_embed, context_length, vocab_size = 4, 32, 8, 64
    B, T = 2, 8

    key = jax.random.PRNGKey(0)
    pkey, ikey = jax.random.split(key)
    params = init_params(pkey, n_head, n_embed, context_length, vocab_size)
    prepped = prepare_params(params)        # one-time weight repack / padding (hoisted)
    idx = jax.random.randint(ikey, (B, T), 0, vocab_size, dtype=jnp.int32)

    logits, loss = transformer_forward(idx, prepped)
    logits = jax.block_until_ready(logits)

    ref_logits, _ = reference_forward(idx, params)
    assert logits.shape == (B, T, vocab_size)
    assert loss is None
    # Tolerance covers bf16 operands at the matmul boundaries (f32 accumulation) and the
    # approximate EUP reciprocal used in the softmax denominator.
    assert jnp.allclose(logits, ref_logits, atol=8e-2, rtol=8e-2), "mismatch vs reference"

    print("KERNEL_OK")
</pallas_src>

<mosaic_0001>
module attributes {stable_mosaic.version = 11 : i64} {
  func.func @_block_kernel(%arg0: i32, %arg1: memref<2x8x32xf32, #tpu.memory_space<vmem>>, %arg2: memref<1x32xf32, #tpu.memory_space<vmem>>, %arg3: memref<1x32xf32, #tpu.memory_space<vmem>>, %arg4: memref<32x96xbf16, #tpu.memory_space<vmem>>, %arg5: memref<1x32xf32, #tpu.memory_space<vmem>>, %arg6: memref<1x32xf32, #tpu.memory_space<vmem>>, %arg7: memref<32x128xbf16, #tpu.memory_space<vmem>>, %arg8: memref<1x128xf32, #tpu.memory_space<vmem>>, %arg9: memref<128x32xbf16, #tpu.memory_space<vmem>>, %arg10: memref<1x32xf32, #tpu.memory_space<vmem>>, %arg11: memref<1x32xf32, #tpu.memory_space<vmem>>, %arg12: memref<1x32xf32, #tpu.memory_space<vmem>>, %arg13: memref<2x8x32xbf16, #tpu.memory_space<vmem>>, %arg14: memref<16x32xf32, #tpu.memory_space<vmem>>) attributes {dimension_semantics = [#tpu.dimension_semantics<parallel>], iteration_bounds = array<i64: 1>, scalar_prefetch = 0 : i64, scratch_operands = 1 : i64, tpu.core_type = #tpu.core_type<tc>, window_params = [{transform_indices = @transform_0, window_bounds = array<i64: 2, 8, 32>}, {pipeline_mode = #tpu.pipeline_mode<synchronous>, transform_indices = @transform_1, window_bounds = array<i64: 1, 32>}, {pipeline_mode = #tpu.pipeline_mode<synchronous>, transform_indices = @transform_2, window_bounds = array<i64: 1, 32>}, {pipeline_mode = #tpu.pipeline_mode<synchronous>, transform_indices = @transform_3, window_bounds = array<i64: 32, 96>}, {pipeline_mode = #tpu.pipeline_mode<synchronous>, transform_indices = @transform_4, window_bounds = array<i64: 1, 32>}, {pipeline_mode = #tpu.pipeline_mode<synchronous>, transform_indices = @transform_5, window_bounds = array<i64: 1, 32>}, {pipeline_mode = #tpu.pipeline_mode<synchronous>, transform_indices = @transform_6, window_bounds = array<i64: 32, 128>}, {pipeline_mode = #tpu.pipeline_mode<synchronous>, transform_indices = @transform_7, window_bounds = array<i64: 1, 128>}, {pipeline_mode = #tpu.pipeline_mode<synchronous>, transform_indices = @transform_8, window_bounds = array<i64: 128, 32>}, {pipeline_mode = #tpu.pipeline_mode<synchronous>, transform_indices = @transform_9, window_bounds = array<i64: 1, 32>}, {pipeline_mode = #tpu.pipeline_mode<synchronous>, transform_indices = @transform_10, window_bounds = array<i64: 1, 32>}, {pipeline_mode = #tpu.pipeline_mode<synchronous>, transform_indices = @transform_11, window_bounds = array<i64: 1, 32>}, {transform_indices = @transform_12, window_bounds = array<i64: 2, 8, 32>}]} {
    %c0 = arith.constant 0 : index
    %c0_0 = arith.constant 0 : index
    %c0_1 = arith.constant 0 : index
    %0 = vector.load %arg1[%c0, %c0_0, %c0_1] : memref<2x8x32xf32, #tpu.memory_space<vmem>>, vector<2x8x32xf32>
    %1 = vector.shape_cast %0 : vector<2x8x32xf32> to vector<16x32xf32>
    %c0_2 = arith.constant 0 : index
    %c0_3 = arith.constant 0 : index
    %2 = vector.load %arg2[%c0_2, %c0_3] : memref<1x32xf32, #tpu.memory_space<vmem>>, vector<1x32xf32>
    %c0_4 = arith.constant 0 : index
    %c0_5 = arith.constant 0 : index
    %3 = vector.load %arg3[%c0_4, %c0_5] : memref<1x32xf32, #tpu.memory_space<vmem>>, vector<1x32xf32>
    %cst = arith.constant dense<0.000000e+00> : vector<16xf32>
    %4 = vector.multi_reduction <add>, %1, %cst [1] : vector<16x32xf32> to vector<16xf32>
    %5 = vector.shape_cast %4 : vector<16xf32> to vector<16x1xf32>
    %cst_6 = arith.constant 3.200000e+01 : f32
    %6 = vector.broadcast %cst_6 : f32 to vector<16x1xf32>
    %7 = arith.divf %5, %6 : vector<16x1xf32>
    %8 = vector.broadcast %7 : vector<16x1xf32> to vector<16x32xf32>
    %9 = arith.subf %1, %8 : vector<16x32xf32>
    %10 = arith.mulf %9, %9 : vector<16x32xf32>
    %cst_7 = arith.constant dense<0.000000e+00> : vector<16xf32>
    %11 = vector.multi_reduction <add>, %10, %cst_7 [1] : vector<16x32xf32> to vector<16xf32>
    %12 = vector.shape_cast %11 : vector<16xf32> to vector<16x1xf32>
    %cst_8 = arith.constant 3.200000e+01 : f32
    %13 = vector.broadcast %cst_8 : f32 to vector<16x1xf32>
    %14 = arith.divf %12, %13 : vector<16x1xf32>
    %15 = vector.broadcast %7 : vector<16x1xf32> to vector<16x32xf32>
    %16 = arith.subf %1, %15 : vector<16x32xf32>
    %cst_9 = arith.constant 9.99999974E-6 : f32
    %17 = vector.broadcast %cst_9 : f32 to vector<16x1xf32>
    %18 = arith.addf %14, %17 : vector<16x1xf32>
    %19 = math.rsqrt %18 : vector<16x1xf32>
    %20 = vector.broadcast %19 : vector<16x1xf32> to vector<16x32xf32>
    %21 = arith.mulf %16, %20 : vector<16x32xf32>
    %22 = vector.broadcast %2 : vector<1x32xf32> to vector<16x32xf32>
    %23 = arith.mulf %21, %22 : vector<16x32xf32>
    %24 = vector.broadcast %3 : vector<1x32xf32> to vector<16x32xf32>
    %25 = arith.addf %23, %24 : vector<16x32xf32>
    %26 = arith.truncf %25 : vector<16x32xf32> to vector<16x32xbf16>
    %c0_10 = arith.constant 0 : index
    %c0_11 = arith.constant 0 : index
    %27 = vector.load %arg4[%c0_10, %c0_11] : memref<32x96xbf16, #tpu.memory_space<vmem>>, vector<32x96xbf16>
    %cst_12 = arith.constant dense<0.000000e+00> : vector<16x96xf32>
    %28 = tpu.matmul %26, %27, %cst_12 {dimension_numbers = #tpu.dot_dimension_numbers<[1], [0], [0], [1], [0, 0, 1, 1], [], []>} : vector<16x32xbf16>, vector<32x96xbf16>, vector<16x96xf32> -> vector<16x96xf32>
    %29 = vector.shape_cast %28 : vector<16x96xf32> to vector<2x8x12x8xf32>
    %30 = tpu.iota {dimensions = array<i32: 0>} : vector<8x8xi32>
    %31 = tpu.iota {dimensions = array<i32: 1>} : vector<8x8xi32>
    %32 = arith.cmpi sge, %30, %31 : vector<8x8xi32>
    %33 = vector.shape_cast %32 : vector<8x8xi1> to vector<1x8x8xi1>
    %34 = vector.extract_strided_slice %29 {offsets = [0, 0, 0, 0], sizes = [1, 8, 12, 8], strides = [1, 1, 1, 1]} : vector<2x8x12x8xf32> to vector<1x8x12x8xf32>
    %35 = vector.shape_cast %34 : vector<1x8x12x8xf32> to vector<8x12x8xf32>
    %36 = tpu.transpose %35, [1, 0, 2] : vector<8x12x8xf32> -> vector<12x8x8xf32>
    %37 = vector.extract_strided_slice %36 {offsets = [0, 0, 0], sizes = [4, 8, 8], strides = [1, 1, 1]} : vector<12x8x8xf32> to vector<4x8x8xf32>
    %38 = arith.truncf %37 : vector<4x8x8xf32> to vector<4x8x8xbf16>
    %39 = vector.extract_strided_slice %36 {offsets = [4, 0, 0], sizes = [4, 8, 8], strides = [1, 1, 1]} : vector<12x8x8xf32> to vector<4x8x8xf32>
    %40 = arith.truncf %39 : vector<4x8x8xf32> to vector<4x8x8xbf16>
    %41 = vector.extract_strided_slice %36 {offsets = [8, 0, 0], sizes = [4, 8, 8], strides = [1, 1, 1]} : vector<12x8x8xf32> to vector<4x8x8xf32>
    %42 = arith.truncf %41 : vector<4x8x8xf32> to vector<4x8x8xbf16>
    "tpu.trace_start"() <{level = 10 : i32, message = "htd,hsd->hts"}> : () -> ()
    %cst_13 = arith.constant dense<0.000000e+00> : vector<4x8x8xf32>
    %43 = tpu.matmul %38, %40, %cst_13 {dimension_numbers = #tpu.dot_dimension_numbers<[2], [2], [1], [1], [0, 0, 0, 1, 1, 1], [0], [0]>} : vector<4x8x8xbf16>, vector<4x8x8xbf16>, vector<4x8x8xf32> -> vector<4x8x8xf32>
    "tpu.trace_stop"() : () -> ()
    %cst_14 = arith.constant 0.176776692 : f32
    %44 = vector.broadcast %cst_14 : f32 to vector<4x8x8xf32>
    %45 = arith.mulf %43, %44 : vector<4x8x8xf32>
    %cst_15 = arith.constant -1.000000e+30 : f32
    %46 = vector.shape_cast %33 : vector<1x8x8xi1> to vector<1x8x8xi1>
    %47 = vector.broadcast %46 : vector<1x8x8xi1> to vector<4x8x8xi1>
    %48 = vector.broadcast %cst_15 : f32 to vector<4x8x8xf32>
    %49 = arith.select %47, %45, %48 : vector<4x8x8xi1>, vector<4x8x8xf32>
    %cst_16 = arith.constant dense<0xFF800000> : vector<4x8xf32>
    %50 = vector.multi_reduction <maximumf>, %49, %cst_16 [2] : vector<4x8x8xf32> to vector<4x8xf32>
    %51 = vector.shape_cast %50 : vector<4x8xf32> to vector<4x8x1xf32>
    %52 = vector.broadcast %51 : vector<4x8x1xf32> to vector<4x8x8xf32>
    %53 = arith.subf %49, %52 : vector<4x8x8xf32>
    %54 = math.exp %53 : vector<4x8x8xf32>
    %cst_17 = arith.constant dense<0.000000e+00> : vector<4x8xf32>
    %55 = vector.multi_reduction <add>, %54, %cst_17 [2] : vector<4x8x8xf32> to vector<4x8xf32>
    %56 = vector.shape_cast %55 : vector<4x8xf32> to vector<4x8x1xf32>
    %57 = tpu.reciprocal %56 {approx = true} : vector<4x8x1xf32> -> vector<4x8x1xf32>
    %58 = vector.broadcast %57 : vector<4x8x1xf32> to vector<4x8x8xf32>
    %59 = arith.mulf %54, %58 : vector<4x8x8xf32>
    %60 = arith.truncf %59 : vector<4x8x8xf32> to vector<4x8x8xbf16>
    "tpu.trace_start"() <{level = 10 : i32, message = "hts,hsd->htd"}> : () -> ()
    %cst_18 = arith.constant dense<0.000000e+00> : vector<4x8x8xf32>
    %61 = tpu.matmul %60, %42, %cst_18 {dimension_numbers = #tpu.dot_dimension_numbers<[2], [1], [1], [2], [0, 0, 0, 1, 1, 2], [0], [0]>} : vector<4x8x8xbf16>, vector<4x8x8xbf16>, vector<4x8x8xf32> -> vector<4x8x8xf32>
    "tpu.trace_stop"() : () -> ()
    %62 = tpu.transpose %61, [1, 0, 2] : vector<4x8x8xf32> -> vector<8x4x8xf32>
    %63 = vector.shape_cast %62 : vector<8x4x8xf32> to vector<8x32xf32>
    %c0_19 = arith.constant 0 : index
    %c0_20 = arith.constant 0 : index
    %64 = vector.load %arg14[%c0_19, %c0_20] : memref<16x32xf32, #tpu.memory_space<vmem>>, vector<8x32xf32>
    tpu.vector_store %arg14[%c0_19, %c0_20], %63 {strides = array<i32>} : memref<16x32xf32, #tpu.memory_space<vmem>>, vector<8x32xf32>,
    %65 = vector.extract_strided_slice %29 {offsets = [1, 0, 0, 0], sizes = [1, 8, 12, 8], strides = [1, 1, 1, 1]} : vector<2x8x12x8xf32> to vector<1x8x12x8xf32>
    %66 = vector.shape_cast %65 : vector<1x8x12x8xf32> to vector<8x12x8xf32>
    %67 = tpu.transpose %66, [1, 0, 2] : vector<8x12x8xf32> -> vector<12x8x8xf32>
    %68 = vector.extract_strided_slice %67 {offsets = [0, 0, 0], sizes = [4, 8, 8], strides = [1, 1, 1]} : vector<12x8x8xf32> to vector<4x8x8xf32>
    %69 = arith.truncf %68 : vector<4x8x8xf32> to vector<4x8x8xbf16>
    %70 = vector.extract_strided_slice %67 {offsets = [4, 0, 0], sizes = [4, 8, 8], strides = [1, 1, 1]} : vector<12x8x8xf32> to vector<4x8x8xf32>
    %71 = arith.truncf %70 : vector<4x8x8xf32> to vector<4x8x8xbf16>
    %72 = vector.extract_strided_slice %67 {offsets = [8, 0, 0], sizes = [4, 8, 8], strides = [1, 1, 1]} : vector<12x8x8xf32> to vector<4x8x8xf32>
    %73 = arith.truncf %72 : vector<4x8x8xf32> to vector<4x8x8xbf16>
    "tpu.trace_start"() <{level = 10 : i32, message = "htd,hsd->hts"}> : () -> ()
    %cst_21 = arith.constant dense<0.000000e+00> : vector<4x8x8xf32>
    %74 = tpu.matmul %69, %71, %cst_21 {dimension_numbers = #tpu.dot_dimension_numbers<[2], [2], [1], [1], [0, 0, 0, 1, 1, 1], [0], [0]>} : vector<4x8x8xbf16>, vector<4x8x8xbf16>, vector<4x8x8xf32> -> vector<4x8x8xf32>
    "tpu.trace_stop"() : () -> ()
    %cst_22 = arith.constant 0.176776692 : f32
    %75 = vector.broadcast %cst_22 : f32 to vector<4x8x8xf32>
    %76 = arith.mulf %74, %75 : vector<4x8x8xf32>
    %cst_23 = arith.constant -1.000000e+30 : f32
    %77 = vector.shape_cast %33 : vector<1x8x8xi1> to vector<1x8x8xi1>
    %78 = vector.broadcast %77 : vector<1x8x8xi1> to vector<4x8x8xi1>
    %79 = vector.broadcast %cst_23 : f32 to vector<4x8x8xf32>
    %80 = arith.select %78, %76, %79 : vector<4x8x8xi1>, vector<4x8x8xf32>
    %cst_24 = arith.constant dense<0xFF800000> : vector<4x8xf32>
    %81 = vector.multi_reduction <maximumf>, %80, %cst_24 [2] : vector<4x8x8xf32> to vector<4x8xf32>
    %82 = vector.shape_cast %81 : vector<4x8xf32> to vector<4x8x1xf32>
    %83 = vector.broadcast %82 : vector<4x8x1xf32> to vector<4x8x8xf32>
    %84 = arith.subf %80, %83 : vector<4x8x8xf32>
    %85 = math.exp %84 : vector<4x8x8xf32>
    %cst_25 = arith.constant dense<0.000000e+00> : vector<4x8xf32>
    %86 = vector.multi_reduction <add>, %85, %cst_25 [2] : vector<4x8x8xf32> to vector<4x8xf32>
    %87 = vector.shape_cast %86 : vector<4x8xf32> to vector<4x8x1xf32>
    %88 = tpu.reciprocal %87 {approx = true} : vector<4x8x1xf32> -> vector<4x8x1xf32>
    %89 = vector.broadcast %88 : vector<4x8x1xf32> to vector<4x8x8xf32>
    %90 = arith.mulf %85, %89 : vector<4x8x8xf32>
    %91 = arith.truncf %90 : vector<4x8x8xf32> to vector<4x8x8xbf16>
    "tpu.trace_start"() <{level = 10 : i32, message = "hts,hsd->htd"}> : () -> ()
    %cst_26 = arith.constant dense<0.000000e+00> : vector<4x8x8xf32>
    %92 = tpu.matmul %91, %73, %cst_26 {dimension_numbers = #tpu.dot_dimension_numbers<[2], [1], [1], [2], [0, 0, 0, 1, 1, 2], [0], [0]>} : vector<4x8x8xbf16>, vector<4x8x8xbf16>, vector<4x8x8xf32> -> vector<4x8x8xf32>
    "tpu.trace_stop"() : () -> ()
    %93 = tpu.transpose %92, [1, 0, 2] : vector<4x8x8xf32> -> vector<8x4x8xf32>
    %94 = vector.shape_cast %93 : vector<8x4x8xf32> to vector<8x32xf32>
    %c8 = arith.constant 8 : index
    %c0_27 = arith.constant 0 : index
    %95 = vector.load %arg14[%c8, %c0_27] : memref<16x32xf32, #tpu.memory_space<vmem>>, vector<8x32xf32>
    tpu.vector_store %arg14[%c8, %c0_27], %94 {strides = array<i32>} : memref<16x32xf32, #tpu.memory_space<vmem>>, vector<8x32xf32>,
    %c0_28 = arith.constant 0 : index
    %c0_29 = arith.constant 0 : index
    %96 = vector.load %arg14[%c0_28, %c0_29] : memref<16x32xf32, #tpu.memory_space<vmem>>, vector<16x32xf32>
    %97 = arith.addf %1, %96 : vector<16x32xf32>
    %c0_30 = arith.constant 0 : index
    %c0_31 = arith.constant 0 : index
    %98 = vector.load %arg5[%c0_30, %c0_31] : memref<1x32xf32, #tpu.memory_space<vmem>>, vector<1x32xf32>
    %c0_32 = arith.constant 0 : index
    %c0_33 = arith.constant 0 : index
    %99 = vector.load %arg6[%c0_32, %c0_33] : memref<1x32xf32, #tpu.memory_space<vmem>>, vector<1x32xf32>
    %cst_34 = arith.constant dense<0.000000e+00> : vector<16xf32>
    %100 = vector.multi_reduction <add>, %97, %cst_34 [1] : vector<16x32xf32> to vector<16xf32>
    %101 = vector.shape_cast %100 : vector<16xf32> to vector<16x1xf32>
    %cst_35 = arith.constant 3.200000e+01 : f32
    %102 = vector.broadcast %cst_35 : f32 to vector<16x1xf32>
    %103 = arith.divf %101, %102 : vector<16x1xf32>
    %104 = vector.broadcast %103 : vector<16x1xf32> to vector<16x32xf32>
    %105 = arith.subf %97, %104 : vector<16x32xf32>
    %106 = arith.mulf %105, %105 : vector<16x32xf32>
    %cst_36 = arith.constant dense<0.000000e+00> : vector<16xf32>
    %107 = vector.multi_reduction <add>, %106, %cst_36 [1] : vector<16x32xf32> to vector<16xf32>
    %108 = vector.shape_cast %107 : vector<16xf32> to vector<16x1xf32>
    %cst_37 = arith.constant 3.200000e+01 : f32
    %109 = vector.broadcast %cst_37 : f32 to vector<16x1xf32>
    %110 = arith.divf %108, %109 : vector<16x1xf32>
    %111 = vector.broadcast %103 : vector<16x1xf32> to vector<16x32xf32>
    %112 = arith.subf %97, %111 : vector<16x32xf32>
    %cst_38 = arith.constant 9.99999974E-6 : f32
    %113 = vector.broadcast %cst_38 : f32 to vector<16x1xf32>
    %114 = arith.addf %110, %113 : vector<16x1xf32>
    %115 = math.rsqrt %114 : vector<16x1xf32>
    %116 = vector.broadcast %115 : vector<16x1xf32> to vector<16x32xf32>
    %117 = arith.mulf %112, %116 : vector<16x32xf32>
    %118 = vector.broadcast %98 : vector<1x32xf32> to vector<16x32xf32>
    %119 = arith.mulf %117, %118 : vector<16x32xf32>
    %120 = vector.broadcast %99 : vector<1x32xf32> to vector<16x32xf32>
    %121 = arith.addf %119, %120 : vector<16x32xf32>
    %122 = arith.truncf %121 : vector<16x32xf32> to vector<16x32xbf16>
    %c0_39 = arith.constant 0 : index
    %c0_40 = arith.constant 0 : index
    %123 = vector.load %arg7[%c0_39, %c0_40] : memref<32x128xbf16, #tpu.memory_space<vmem>>, vector<32x128xbf16>
    %cst_41 = arith.constant dense<0.000000e+00> : vector<16x128xf32>
    %124 = tpu.matmul %122, %123, %cst_41 {dimension_numbers = #tpu.dot_dimension_numbers<[1], [0], [0], [1], [0, 0, 1, 1], [], []>} : vector<16x32xbf16>, vector<32x128xbf16>, vector<16x128xf32> -> vector<16x128xf32>
    %c0_42 = arith.constant 0 : index
    %c0_43 = arith.constant 0 : index
    %125 = vector.load %arg8[%c0_42, %c0_43] : memref<1x128xf32, #tpu.memory_space<vmem>>, vector<1x128xf32>
    %126 = vector.broadcast %125 : vector<1x128xf32> to vector<16x128xf32>
    %127 = arith.addf %124, %126 : vector<16x128xf32>
    %cst_44 = arith.constant 0.000000e+00 : f32
    %128 = vector.broadcast %cst_44 : f32 to vector<16x128xf32>
    %129 = arith.maximumf %127, %128 : vector<16x128xf32>
    %130 = arith.truncf %129 : vector<16x128xf32> to vector<16x128xbf16>
    %c0_45 = arith.constant 0 : index
    %c0_46 = arith.constant 0 : index
    %131 = vector.load %arg9[%c0_45, %c0_46] : memref<128x32xbf16, #tpu.memory_space<vmem>>, vector<128x32xbf16>
    %cst_47 = arith.constant dense<0.000000e+00> : vector<16x32xf32>
    %132 = tpu.matmul %130, %131, %cst_47 {dimension_numbers = #tpu.dot_dimension_numbers<[1], [0], [0], [1], [0, 0, 1, 1], [], []>} : vector<16x128xbf16>, vector<128x32xbf16>, vector<16x32xf32> -> vector<16x32xf32>
    %c0_48 = arith.constant 0 : index
    %c0_49 = arith.constant 0 : index
    %133 = vector.load %arg10[%c0_48, %c0_49] : memref<1x32xf32, #tpu.memory_space<vmem>>, vector<1x32xf32>
    %134 = vector.broadcast %133 : vector<1x32xf32> to vector<16x32xf32>
    %135 = arith.addf %132, %134 : vector<16x32xf32>
    %136 = arith.addf %97, %135 : vector<16x32xf32>
    %c0_50 = arith.constant 0 : index
    %c0_51 = arith.constant 0 : index
    %137 = vector.load %arg11[%c0_50, %c0_51] : memref<1x32xf32, #tpu.memory_space<vmem>>, vector<1x32xf32>
    %c0_52 = arith.constant 0 : index
    %c0_53 = arith.constant 0 : index
    %138 = vector.load %arg12[%c0_52, %c0_53] : memref<1x32xf32, #tpu.memory_space<vmem>>, vector<1x32xf32>
    %cst_54 = arith.constant dense<0.000000e+00> : vector<16xf32>
    %139 = vector.multi_reduction <add>, %136, %cst_54 [1] : vector<16x32xf32> to vector<16xf32>
    %140 = vector.shape_cast %139 : vector<16xf32> to vector<16x1xf32>
    %cst_55 = arith.constant 3.200000e+01 : f32
    %141 = vector.broadcast %cst_55 : f32 to vector<16x1xf32>
    %142 = arith.divf %140, %141 : vector<16x1xf32>
    %143 = vector.broadcast %142 : vector<16x1xf32> to vector<16x32xf32>
    %144 = arith.subf %136, %143 : vector<16x32xf32>
    %145 = arith.mulf %144, %144 : vector<16x32xf32>
    %cst_56 = arith.constant dense<0.000000e+00> : vector<16xf32>
    %146 = vector.multi_reduction <add>, %145, %cst_56 [1] : vector<16x32xf32> to vector<16xf32>
    %147 = vector.shape_cast %146 : vector<16xf32> to vector<16x1xf32>
    %cst_57 = arith.constant 3.200000e+01 : f32
    %148 = vector.broadcast %cst_57 : f32 to vector<16x1xf32>
    %149 = arith.divf %147, %148 : vector<16x1xf32>
    %150 = vector.broadcast %142 : vector<16x1xf32> to vector<16x32xf32>
    %151 = arith.subf %136, %150 : vector<16x32xf32>
    %cst_58 = arith.constant 9.99999974E-6 : f32
    %152 = vector.broadcast %cst_58 : f32 to vector<16x1xf32>
    %153 = arith.addf %149, %152 : vector<16x1xf32>
    %154 = math.rsqrt %153 : vector<16x1xf32>
    %155 = vector.broadcast %154 : vector<16x1xf32> to vector<16x32xf32>
    %156 = arith.mulf %151, %155 : vector<16x32xf32>
    %157 = vector.broadcast %137 : vector<1x32xf32> to vector<16x32xf32>
    %158 = arith.mulf %156, %157 : vector<16x32xf32>
    %159 = vector.broadcast %138 : vector<1x32xf32> to vector<16x32xf32>
    %160 = arith.addf %158, %159 : vector<16x32xf32>
    %161 = arith.truncf %160 : vector<16x32xf32> to vector<16x32xbf16>
    %162 = vector.shape_cast %161 : vector<16x32xbf16> to vector<2x8x32xbf16>
    %c0_59 = arith.constant 0 : index
    %c0_60 = arith.constant 0 : index
    %c0_61 = arith.constant 0 : index
    %163 = vector.load %arg13[%c0_59, %c0_60, %c0_61] : memref<2x8x32xbf16, #tpu.memory_space<vmem>>, vector<2x8x32xbf16>
    tpu.vector_store %arg13[%c0_59, %c0_60, %c0_61], %162 {strides = array<i32>} : memref<2x8x32xbf16, #tpu.memory_space<vmem>>, vector<2x8x32xbf16>,
    return
  }
  func.func @transform_0(%arg0: i32) -> (i32, i32, i32) {
    %c0_i32 = arith.constant 0 : i32
    %c0_i32_0 = arith.constant 0 : i32
    %c0_i32_1 = arith.constant 0 : i32
    return %arg0, %c0_i32, %c0_i32_0 : i32, i32, i32
  }
  func.func @transform_1(%arg0: i32) -> (i32, i32) {
    %c0_i32 = arith.constant 0 : i32
    %c0_i32_0 = arith.constant 0 : i32
    %c0_i32_1 = arith.constant 0 : i32
    return %c0_i32, %c0_i32_0 : i32, i32
  }
  func.func @transform_2(%arg0: i32) -> (i32, i32) {
    %c0_i32 = arith.constant 0 : i32
    %c0_i32_0 = arith.constant 0 : i32
    %c0_i32_1 = arith.constant 0 : i32
    return %c0_i32, %c0_i32_0 : i32, i32
  }
  func.func @transform_3(%arg0: i32) -> (i32, i32) {
    %c0_i32 = arith.constant 0 : i32
    %c0_i32_0 = arith.constant 0 : i32
    %c0_i32_1 = arith.constant 0 : i32
    return %c0_i32, %c0_i32_0 : i32, i32
  }
  func.func @transform_4(%arg0: i32) -> (i32, i32) {
    %c0_i32 = arith.constant 0 : i32
    %c0_i32_0 = arith.constant 0 : i32
    %c0_i32_1 = arith.constant 0 : i32
    return %c0_i32, %c0_i32_0 : i32, i32
  }
  func.func @transform_5(%arg0: i32) -> (i32, i32) {
    %c0_i32 = arith.constant 0 : i32
    %c0_i32_0 = arith.constant 0 : i32
    %c0_i32_1 = arith.constant 0 : i32
    return %c0_i32, %c0_i32_0 : i32, i32
  }
  func.func @transform_6(%arg0: i32) -> (i32, i32) {
    %c0_i32 = arith.constant 0 : i32
    %c0_i32_0 = arith.constant 0 : i32
    %c0_i32_1 = arith.constant 0 : i32
    return %c0_i32, %c0_i32_0 : i32, i32
  }
  func.func @transform_7(%arg0: i32) -> (i32, i32) {
    %c0_i32 = arith.constant 0 : i32
    %c0_i32_0 = arith.constant 0 : i32
    %c0_i32_1 = arith.constant 0 : i32
    return %c0_i32, %c0_i32_0 : i32, i32
  }
  func.func @transform_8(%arg0: i32) -> (i32, i32) {
    %c0_i32 = arith.constant 0 : i32
    %c0_i32_0 = arith.constant 0 : i32
    %c0_i32_1 = arith.constant 0 : i32
    return %c0_i32, %c0_i32_0 : i32, i32
  }
  func.func @transform_9(%arg0: i32) -> (i32, i32) {
    %c0_i32 = arith.constant 0 : i32
    %c0_i32_0 = arith.constant 0 : i32
    %c0_i32_1 = arith.constant 0 : i32
    return %c0_i32, %c0_i32_0 : i32, i32
  }
  func.func @transform_10(%arg0: i32) -> (i32, i32) {
    %c0_i32 = arith.constant 0 : i32
    %c0_i32_0 = arith.constant 0 : i32
    %c0_i32_1 = arith.constant 0 : i32
    return %c0_i32, %c0_i32_0 : i32, i32
  }
  func.func @transform_11(%arg0: i32) -> (i32, i32) {
    %c0_i32 = arith.constant 0 : i32
    %c0_i32_0 = arith.constant 0 : i32
    %c0_i32_1 = arith.constant 0 : i32
    return %c0_i32, %c0_i32_0 : i32, i32
  }
  func.func @transform_12(%arg0: i32) -> (i32, i32, i32) {
    %c0_i32 = arith.constant 0 : i32
    %c0_i32_0 = arith.constant 0 : i32
    %c0_i32_1 = arith.constant 0 : i32
    return %arg0, %c0_i32, %c0_i32_0 : i32, i32, i32
  }
}

</mosaic_0001>

<llo_original>
// kernel: tpu_custom_call.1
$region0: #{tpu_custom_call.1}
  #allocation0 [shape = 'u32[]', space=smem, size = 0x4, offset = 0x4, fixed_abs, tag = 'smem constant byte address 0x4 - core index']
  #allocation1 [shape = 'u32[72,128]{1,0:T(1,128)}', space=vmem, size = 0x9000, scoped, tag = 'internal scratch']
  #allocation2 [shape = 'f32[16,32]{1,0:T(8,128)}', space=vmem, size = 0x2000, scoped, tag = 'scratch operand']
  %s0 = inlined_call_operand.vmem [shape: f32[2,8,32], index: 0, kind: input, shape index: {}]
  %s1 = inlined_call_operand.vmem [shape: f32[1,32], index: 1, kind: input, shape index: {}]
  %s2 = inlined_call_operand.vmem [shape: f32[1,32], index: 2, kind: input, shape index: {}]
  %s3 = inlined_call_operand.vmem [shape: bf16[32,96], index: 3, kind: input, shape index: {}]
  %s4 = inlined_call_operand.vmem [shape: f32[1,32], index: 4, kind: input, shape index: {}]
  %s5 = inlined_call_operand.vmem [shape: f32[1,32], index: 5, kind: input, shape index: {}]
  %s6 = inlined_call_operand.vmem [shape: bf16[32,128], index: 6, kind: input, shape index: {}]
  %s7 = inlined_call_operand.vmem [shape: f32[1,128], index: 7, kind: input, shape index: {}]
  %s8 = inlined_call_operand.vmem [shape: bf16[128,32], index: 8, kind: input, shape index: {}]
  %s9 = inlined_call_operand.vmem [shape: f32[1,32], index: 9, kind: input, shape index: {}]
  %s10 = inlined_call_operand.vmem [shape: f32[1,32], index: 10, kind: input, shape index: {}]
  %s11 = inlined_call_operand.vmem [shape: f32[1,32], index: 11, kind: input, shape index: {}]
  %s12 = inlined_call_operand.hbm [shape: bf16[2,8,32], index: 12, kind: output, shape index: {}]
  %s13 = sld [smem:[#allocation0]]
  $region58: #{tpu_custom_call.1} parent=0
    _
  %s15 = ssub.s32 1, %s13
  %s16 = scalar_select 0, %s15, %s13
  $region1: #{tpu_custom_call.1} parent=0
    #allocation3 [shape = 'u8[4096]{0}', space=vmem, size = 0x1000, scoped, tag = 'output window, operand 0, single buffered']
    #allocation4 [shape = 's32[1]{0}', space=sflag, size = 0x4, scoped, tag = 'scoped memory for tpu_custom_call.1']
    %17 = vsyncpa [#allocation4], 0
    // Predicated region
    $region2: #{tpu_custom_call.1} parent=1 // pred_check
      _
    $region3: #{tpu_custom_call.1} parent=1 // pred_check_branch
      %19 = sbr.rel (0) target = $region5
    $region4: #{tpu_custom_call.1} parent=1 // pred_region
      _
    $region5: #{tpu_custom_call.1} parent=1 // pred_fallthru
      _
    // Predicated region
    $region6: #{tpu_custom_call.1} parent=1 // pred_check
      _
    $region7: #{tpu_custom_call.1} parent=1 // pred_check_branch
      %21 = sbr.rel (0) target = $region9
    $region8: #{tpu_custom_call.1} parent=1 // pred_region
      _
    $region9: #{tpu_custom_call.1} parent=1 // pred_fallthru
      _
    // Predicated region
    $region10: #{tpu_custom_call.1} parent=1 // pred_check
      _
    $region11: #{tpu_custom_call.1} parent=1 // pred_check_branch
      %23 = sbr.rel (0) target = $region13
    $region12: #{tpu_custom_call.1} parent=1 // pred_region
      _
    $region13: #{tpu_custom_call.1} parent=1 // pred_fallthru
      _
    // Predicated region
    $region14: #{tpu_custom_call.1} parent=1 // pred_check
      _
    $region15: #{tpu_custom_call.1} parent=1 // pred_check_branch
      %25 = sbr.rel (0) target = $region17
    $region16: #{tpu_custom_call.1} parent=1 // pred_region
      _
    $region17: #{tpu_custom_call.1} parent=1 // pred_fallthru
      _
    // Predicated region
    $region18: #{tpu_custom_call.1} parent=1 // pred_check
      _
    $region19: #{tpu_custom_call.1} parent=1 // pred_check_branch
      %27 = sbr.rel (0) target = $region21
    $region20: #{tpu_custom_call.1} parent=1 // pred_region
      _
    $region21: #{tpu_custom_call.1} parent=1 // pred_fallthru
      _
    // Predicated region
    $region22: #{tpu_custom_call.1} parent=1 // pred_check
      _
    $region23: #{tpu_custom_call.1} parent=1 // pred_check_branch
      %29 = sbr.rel (0) target = $region25
    $region24: #{tpu_custom_call.1} parent=1 // pred_region
      _
    $region25: #{tpu_custom_call.1} parent=1 // pred_fallthru
      _
    // Predicated region
    $region26: #{tpu_custom_call.1} parent=1 // pred_check
      _
    $region27: #{tpu_custom_call.1} parent=1 // pred_check_branch
      %31 = sbr.rel (0) target = $region29
    $region28: #{tpu_custom_call.1} parent=1 // pred_region
      _
    $region29: #{tpu_custom_call.1} parent=1 // pred_fallthru
      _
    // Predicated region
    $region30: #{tpu_custom_call.1} parent=1 // pred_check
      _
    $region31: #{tpu_custom_call.1} parent=1 // pred_check_branch
      %33 = sbr.rel (0) target = $region33
    $region32: #{tpu_custom_call.1} parent=1 // pred_region
      _
    $region33: #{tpu_custom_call.1} parent=1 // pred_fallthru
      _
    // Predicated region
    $region34: #{tpu_custom_call.1} parent=1 // pred_check
      _
    $region35: #{tpu_custom_call.1} parent=1 // pred_check_branch
      %35 = sbr.rel (0) target = $region37
    $region36: #{tpu_custom_call.1} parent=1 // pred_region
      _
    $region37: #{tpu_custom_call.1} parent=1 // pred_fallthru
      _
    // Predicated region
    $region38: #{tpu_custom_call.1} parent=1 // pred_check
      _
    $region39: #{tpu_custom_call.1} parent=1 // pred_check_branch
      %37 = sbr.rel (0) target = $region41
    $region40: #{tpu_custom_call.1} parent=1 // pred_region
      _
    $region41: #{tpu_custom_call.1} parent=1 // pred_fallthru
      _
    // Predicated region
    $region42: #{tpu_custom_call.1} parent=1 // pred_check
      _
    $region43: #{tpu_custom_call.1} parent=1 // pred_check_branch
      %39 = sbr.rel (0) target = $region45
    $region44: #{tpu_custom_call.1} parent=1 // pred_region
      _
    $region45: #{tpu_custom_call.1} parent=1 // pred_fallthru
      _
    // Predicated region
    $region46: #{tpu_custom_call.1} parent=1 // pred_check
      _
    $region47: #{tpu_custom_call.1} parent=1 // pred_check_branch
      %41 = sbr.rel (0) target = $region49
    $region48: #{tpu_custom_call.1} parent=1 // pred_region
      _
    $region49: #{tpu_custom_call.1} parent=1 // pred_fallthru
      _
    %v43 = vld [vmem:[%s0] sm:$0xff]
    %v44 = vld [vmem:[%s0 + $0x8] sm:$0xff]
    %v45 = vld [vmem:[%s1] sm:$0x1]
    %v46 = vld [vmem:[%s2] sm:$0x1]
    %vm47 = vcmask 261120
    %v48 = vsel %vm47, %v43, 0.0
    %49 = vadd.xlane.f32.xlu0 %v48
    %v50 = vpop.xlane.xlu0 %49
    %v51 = vsel %vm47, %v44, 0.0
    %52 = vadd.xlane.f32.xlu0 %v51
    %v53 = vpop.xlane.xlu0 %52
    %v54 = vrcp.pop 32.0
    %v55 = vmul.f32 32.0, %v54
    %v56 = vsub.f32 1.0, %v55
    %v57 = vmul.f32 %v54, %v56
    %v58 = vadd.f32 %v54, %v57
    %vm59 = vweird.f32 %v54
    %v60 = vsel %vm59, %v54, %v58
    %v61 = vmul.f32 %v50, %v60
    %v62 = vmul.f32 %v53, %v60
    %v63 = vsub.f32 %v43, %v61
    %v64 = vsub.f32 %v44, %v62
    %v65 = vmul.f32 %v63, %v63
    %v66 = vmul.f32 %v64, %v64
    %v67 = vsel %vm47, %v65, 0.0
    %68 = vadd.xlane.f32.xlu0 %v67
    %v69 = vpop.xlane.xlu0 %68
    %v70 = vsel %vm47, %v66, 0.0
    %71 = vadd.xlane.f32.xlu0 %v70
    %v72 = vpop.xlane.xlu0 %71
    %v73 = vmul.f32 %v69, %v60
    %v74 = vmul.f32 %v72, %v60
    %v75 = vadd.f32 %v73, 1e-05
    %v76 = vadd.f32 %v74, 1e-05
    %v77 = vrsqrt.pop %v75
    %v78 = vmul.f32 %v77, %v75
    %v79 = vmul.f32 %v78, %v77
    %v80 = vmul.f32 0.5, %v79
    %v81 = vsub.f32 1.5, %v80
    %v82 = vmul.f32 %v77, %v81
    %vm83 = vweird.f32 %v75
    %vm84 = vweird.f32 %v77
    %vm85 = vmor %vm83, %vm84
    %v86 = vsel %vm85, %v77, %v82
    %v87 = vrsqrt.pop %v76
    %v88 = vmul.f32 %v87, %v76
    %v89 = vmul.f32 %v88, %v87
    %v90 = vmul.f32 0.5, %v89
    %v91 = vsub.f32 1.5, %v90
    %v92 = vmul.f32 %v87, %v91
    %vm93 = vweird.f32 %v76
    %vm94 = vweird.f32 %v87
    %vm95 = vmor %vm93, %vm94
    %v96 = vsel %vm95, %v87, %v92
    %v97 = vmul.f32 %v63, %v86
    %v98 = vmul.f32 %v64, %v96
    %v100 = vperm.slane %v45, 0
    %v102 = vmul.f32 %v97, %v100
    %v103 = vmul.f32 %v98, %v100
    %v105 = vperm.slane %v46, 0
    %v107 = vadd.f32 %v102, %v105
    %v108 = vadd.f32 %v103, %v105
    %v109 = vpack.c.bf16 %v108, %v107
    %v110 = vld [vmem:[%s3] sm:$0xf]
    %v111 = vld [vmem:[%s3 + $0x4] sm:$0xf]
    %v112 = vld [vmem:[%s3 + $0x8] sm:$0xf]
    %v113 = vld [vmem:[%s3 + $0xc] sm:$0xf]
    %v118 = vunpack.c.l.b16 %v110
    %v119 = vunpack.c.l.b16 %v111
    %v120 = vunpack.c.l.b16 %v112
    %v121 = vunpack.c.l.b16 %v113
    %v122 = vpack.c.b16 %v119, %v118
    %v123 = vpack.c.b16 %v121, %v120
    %v127 = vsel %vm47, %v109, 0
    %129 = vmatpush.bf16.msra.mxu0 0
    %130 = vmatpush.bf16.msra.mxu0 0
    %131 = vmatpush.bf16.msra.mxu0 0
    %132 = vmatpush.bf16.msra.mxu0 0
    %133 = vmatpush.bf16.msra.mxu0 0
    %134 = vmatpush.bf16.msra.mxu0 0
    %135 = vmatpush.bf16.msra.mxu0 %v123
    %136 = vmatpush.bf16.msra.mxu0 %v122
    %137 = vmatmul.bf16.gmra.mxu0 %v127
    %v138 = vpop.f32.mrf.mxu0
    %v139 = vadd.f32 0.0, %v138
    %v140 = vpop.f32.mrf.mxu0
    %v141 = vadd.f32 0.0, %v140
    %142 = vdwg.mxu0
    %145 = vrot.lane.b32.xlu0 %v139, 120
    %v146 = vpop.permute.xlu0 %145
    %147 = vrot.lane.b32.xlu0 %v141, 120
    %v148 = vpop.permute.xlu0 %147
    %151 = vrot.lane.b32.xlu0 %v139, 112
    %v152 = vpop.permute.xlu0 %151
    %153 = vrot.lane.b32.xlu0 %v141, 112
    %v154 = vpop.permute.xlu0 %153
    %157 = vrot.lane.b32.xlu0 %v139, 104
    %v158 = vpop.permute.xlu0 %157
    %159 = vrot.lane.b32.xlu0 %v141, 104
    %v160 = vpop.permute.xlu0 %159
    %163 = vrot.lane.b32.xlu0 %v139, 96
    %v164 = vpop.permute.xlu0 %163
    %165 = vrot.lane.b32.xlu0 %v141, 96
    %v166 = vpop.permute.xlu0 %165
    %169 = vrot.lane.b32.xlu0 %v139, 88
    %v170 = vpop.permute.xlu0 %169
    %171 = vrot.lane.b32.xlu0 %v141, 88
    %v172 = vpop.permute.xlu0 %171
    %175 = vrot.lane.b32.xlu0 %v139, 80
    %v176 = vpop.permute.xlu0 %175
    %177 = vrot.lane.b32.xlu0 %v141, 80
    %v178 = vpop.permute.xlu0 %177
    %181 = vrot.lane.b32.xlu0 %v139, 72
    %v182 = vpop.permute.xlu0 %181
    %183 = vrot.lane.b32.xlu0 %v141, 72
    %v184 = vpop.permute.xlu0 %183
    %187 = vrot.lane.b32.xlu0 %v139, 64
    %v188 = vpop.permute.xlu0 %187
    %189 = vrot.lane.b32.xlu0 %v141, 64
    %v190 = vpop.permute.xlu0 %189
    %193 = vrot.lane.b32.xlu0 %v139, 56
    %v194 = vpop.permute.xlu0 %193
    %195 = vrot.lane.b32.xlu0 %v141, 56
    %v196 = vpop.permute.xlu0 %195
    %199 = vrot.lane.b32.xlu0 %v139, 48
    %v200 = vpop.permute.xlu0 %199
    %201 = vrot.lane.b32.xlu0 %v141, 48
    %v202 = vpop.permute.xlu0 %201
    %205 = vrot.lane.b32.xlu0 %v139, 40
    %v206 = vpop.permute.xlu0 %205
    %207 = vrot.lane.b32.xlu0 %v141, 40
    %v208 = vpop.permute.xlu0 %207
    %v211 = vrot.slane %v152, 4
    %vm212 = vcmask 1047556
    %v213 = vsel %vm212, %v211, %v139
    %v214 = vrot.slane %v139, 4
    %v215 = vsel %vm212, %v152, %v214
    %v217 = vunpack.c.l.s4 1983009808
    %v218 = vunpack.c.0.s8 %v217
    %v219 = vperm.slane %v213, %v218
    %v221 = vunpack.c.l.s4 1983009808
    %v222 = vunpack.c.0.s8 %v221
    %v223 = vperm.slane %v215, %v222
    %v224 = vrot.slane %v158, 4
    %v225 = vsel %vm212, %v224, %v146
    %v226 = vrot.slane %v146, 4
    %v227 = vsel %vm212, %v158, %v226
    %v229 = vunpack.c.l.s4 1983009808
    %v230 = vunpack.c.0.s8 %v229
    %v231 = vperm.slane %v225, %v230
    %v233 = vunpack.c.l.s4 1983009808
    %v234 = vunpack.c.0.s8 %v233
    %v235 = vperm.slane %v227, %v234
    %v236 = vrot.slane %v176, 4
    %v237 = vsel %vm212, %v236, %v164
    %v238 = vrot.slane %v164, 4
    %v239 = vsel %vm212, %v176, %v238
    %v241 = vunpack.c.l.s4 1983009808
    %v242 = vunpack.c.0.s8 %v241
    %v243 = vperm.slane %v237, %v242
    %v245 = vunpack.c.l.s4 1983009808
    %v246 = vunpack.c.0.s8 %v245
    %v247 = vperm.slane %v239, %v246
    %v248 = vrot.slane %v182, 4
    %v249 = vsel %vm212, %v248, %v170
    %v250 = vrot.slane %v170, 4
    %v251 = vsel %vm212, %v182, %v250
    %v253 = vunpack.c.l.s4 1983009808
    %v254 = vunpack.c.0.s8 %v253
    %v255 = vperm.slane %v249, %v254
    %v257 = vunpack.c.l.s4 1983009808
    %v258 = vunpack.c.0.s8 %v257
    %v259 = vperm.slane %v251, %v258
    %v260 = vrot.slane %v231, 4
    %v261 = vsel %vm212, %v260, %v219
    %v262 = vrot.slane %v219, 4
    %v263 = vsel %vm212, %v231, %v262
    %v265 = vunpack.c.l.s4 1934713408
    %v266 = vunpack.c.0.s8 %v265
    %v267 = vperm.slane %v261, %v266
    %v269 = vunpack.c.l.s4 1934713408
    %v270 = vunpack.c.0.s8 %v269
    %v271 = vperm.slane %v263, %v270
    %v272 = vrot.slane %v235, 4
    %v273 = vsel %vm212, %v272, %v223
    %v274 = vrot.slane %v223, 4
    %v275 = vsel %vm212, %v235, %v274
    %v277 = vunpack.c.l.s4 1934713408
    %v278 = vunpack.c.0.s8 %v277
    %v279 = vperm.slane %v273, %v278
    %v281 = vunpack.c.l.s4 1934713408
    %v282 = vunpack.c.0.s8 %v281
    %v283 = vperm.slane %v275, %v282
    %v284 = vrot.slane %v255, 4
    %v285 = vsel %vm212, %v284, %v243
    %v286 = vrot.slane %v243, 4
    %v287 = vsel %vm212, %v255, %v286
    %v289 = vunpack.c.l.s4 1934713408
    %v290 = vunpack.c.0.s8 %v289
    %v291 = vperm.slane %v285, %v290
    %v293 = vunpack.c.l.s4 1934713408
    %v294 = vunpack.c.0.s8 %v293
    %v295 = vperm.slane %v287, %v294
    %v296 = vrot.slane %v259, 4
    %v297 = vsel %vm212, %v296, %v247
    %v298 = vrot.slane %v247, 4
    %v299 = vsel %vm212, %v259, %v298
    %v301 = vunpack.c.l.s4 1934713408
    %v302 = vunpack.c.0.s8 %v301
    %v303 = vperm.slane %v297, %v302
    %v305 = vunpack.c.l.s4 1934713408
    %v306 = vunpack.c.0.s8 %v305
    %v307 = vperm.slane %v299, %v306
    %v308 = vrot.slane %v291, 4
    %v309 = vsel %vm212, %v308, %v267
    %v310 = vrot.slane %v267, 4
    %v311 = vsel %vm212, %v291, %v310
    %v312 = vrot.slane %v295, 4
    %v313 = vsel %vm212, %v312, %v271
    %v314 = vrot.slane %v271, 4
    %v315 = vsel %vm212, %v295, %v314
    %v316 = vrot.slane %v303, 4
    %v317 = vsel %vm212, %v316, %v279
    %v318 = vrot.slane %v279, 4
    %v319 = vsel %vm212, %v303, %v318
    %v320 = vrot.slane %v307, 4
    %v321 = vsel %vm212, %v320, %v283
    %v322 = vrot.slane %v283, 4
    %v323 = vsel %vm212, %v307, %v322
    %v324 = vrot.slane %v200, 4
    %v325 = vsel %vm212, %v324, %v188
    %v326 = vrot.slane %v188, 4
    %v327 = vsel %vm212, %v200, %v326
    %v329 = vunpack.c.l.s4 1983009808
    %v330 = vunpack.c.0.s8 %v329
    %v331 = vperm.slane %v325, %v330
    %v333 = vunpack.c.l.s4 1983009808
    %v334 = vunpack.c.0.s8 %v333
    %v335 = vperm.slane %v327, %v334
    %v336 = vrot.slane %v206, 4
    %v337 = vsel %vm212, %v336, %v194
    %v338 = vrot.slane %v194, 4
    %v339 = vsel %vm212, %v206, %v338
    %v341 = vunpack.c.l.s4 1983009808
    %v342 = vunpack.c.0.s8 %v341
    %v343 = vperm.slane %v337, %v342
    %v345 = vunpack.c.l.s4 1983009808
    %v346 = vunpack.c.0.s8 %v345
    %v347 = vperm.slane %v339, %v346
    %v348 = vrot.slane %v343, 4
    %v349 = vsel %vm212, %v348, %v331
    %v350 = vrot.slane %v331, 4
    %v351 = vsel %vm212, %v343, %v350
    %v353 = vunpack.c.l.s4 1934713408
    %v354 = vunpack.c.0.s8 %v353
    %v355 = vperm.slane %v349, %v354
    %v357 = vunpack.c.l.s4 1934713408
    %v358 = vunpack.c.0.s8 %v357
    %v359 = vperm.slane %v351, %v358
    %v360 = vrot.slane %v347, 4
    %v361 = vsel %vm212, %v360, %v335
    %v362 = vrot.slane %v335, 4
    %v363 = vsel %vm212, %v347, %v362
    %v365 = vunpack.c.l.s4 1934713408
    %v366 = vunpack.c.0.s8 %v365
    %v367 = vperm.slane %v361, %v366
    %v369 = vunpack.c.l.s4 1934713408
    %v370 = vunpack.c.0.s8 %v369
    %v371 = vperm.slane %v363, %v370
    %v372 = vrot.slane %v355, 4
    %v373 = vsel %vm212, 0.0, %v372
    %v374 = vrot.slane %v359, 4
    %v375 = vsel %vm212, 0.0, %v374
    %v376 = vrot.slane %v367, 4
    %v377 = vsel %vm212, 0.0, %v376
    %v378 = vrot.slane %v371, 4
    %v379 = vsel %vm212, 0.0, %v378
    %v380 = vrot.slane %v154, 4
    %v381 = vsel %vm212, %v380, %v141
    %v382 = vrot.slane %v141, 4
    %v383 = vsel %vm212, %v154, %v382
    %v385 = vunpack.c.l.s4 1983009808
    %v386 = vunpack.c.0.s8 %v385
    %v387 = vperm.slane %v381, %v386
    %v389 = vunpack.c.l.s4 1983009808
    %v390 = vunpack.c.0.s8 %v389
    %v391 = vperm.slane %v383, %v390
    %v392 = vrot.slane %v160, 4
    %v393 = vsel %vm212, %v392, %v148
    %v394 = vrot.slane %v148, 4
    %v395 = vsel %vm212, %v160, %v394
    %v397 = vunpack.c.l.s4 1983009808
    %v398 = vunpack.c.0.s8 %v397
    %v399 = vperm.slane %v393, %v398
    %v401 = vunpack.c.l.s4 1983009808
    %v402 = vunpack.c.0.s8 %v401
    %v403 = vperm.slane %v395, %v402
    %v404 = vrot.slane %v178, 4
    %v405 = vsel %vm212, %v404, %v166
    %v406 = vrot.slane %v166, 4
    %v407 = vsel %vm212, %v178, %v406
    %v409 = vunpack.c.l.s4 1983009808
    %v410 = vunpack.c.0.s8 %v409
    %v411 = vperm.slane %v405, %v410
    %v413 = vunpack.c.l.s4 1983009808
    %v414 = vunpack.c.0.s8 %v413
    %v415 = vperm.slane %v407, %v414
    %v416 = vrot.slane %v184, 4
    %v417 = vsel %vm212, %v416, %v172
    %v418 = vrot.slane %v172, 4
    %v419 = vsel %vm212, %v184, %v418
    %v421 = vunpack.c.l.s4 1983009808
    %v422 = vunpack.c.0.s8 %v421
    %v423 = vperm.slane %v417, %v422
    %v425 = vunpack.c.l.s4 1983009808
    %v426 = vunpack.c.0.s8 %v425
    %v427 = vperm.slane %v419, %v426
    %v428 = vrot.slane %v399, 4
    %v429 = vsel %vm212, %v428, %v387
    %v430 = vrot.slane %v387, 4
    %v431 = vsel %vm212, %v399, %v430
    %v433 = vunpack.c.l.s4 1934713408
    %v434 = vunpack.c.0.s8 %v433
    %v435 = vperm.slane %v429, %v434
    %v437 = vunpack.c.l.s4 1934713408
    %v438 = vunpack.c.0.s8 %v437
    %v439 = vperm.slane %v431, %v438
    %v440 = vrot.slane %v403, 4
    %v441 = vsel %vm212, %v440, %v391
    %v442 = vrot.slane %v391, 4
    %v443 = vsel %vm212, %v403, %v442
    %v445 = vunpack.c.l.s4 1934713408
    %v446 = vunpack.c.0.s8 %v445
    %v447 = vperm.slane %v441, %v446
    %v449 = vunpack.c.l.s4 1934713408
    %v450 = vunpack.c.0.s8 %v449
    %v451 = vperm.slane %v443, %v450
    %v452 = vrot.slane %v423, 4
    %v453 = vsel %vm212, %v452, %v411
    %v454 = vrot.slane %v411, 4
    %v455 = vsel %vm212, %v423, %v454
    %v457 = vunpack.c.l.s4 1934713408
    %v458 = vunpack.c.0.s8 %v457
    %v459 = vperm.slane %v453, %v458
    %v461 = vunpack.c.l.s4 1934713408
    %v462 = vunpack.c.0.s8 %v461
    %v463 = vperm.slane %v455, %v462
    %v464 = vrot.slane %v427, 4
    %v465 = vsel %vm212, %v464, %v415
    %v466 = vrot.slane %v415, 4
    %v467 = vsel %vm212, %v427, %v466
    %v469 = vunpack.c.l.s4 1934713408
    %v470 = vunpack.c.0.s8 %v469
    %v471 = vperm.slane %v465, %v470
    %v473 = vunpack.c.l.s4 1934713408
    %v474 = vunpack.c.0.s8 %v473
    %v475 = vperm.slane %v467, %v474
    %v476 = vrot.slane %v459, 4
    %v477 = vsel %vm212, %v476, %v435
    %v478 = vrot.slane %v435, 4
    %v479 = vsel %vm212, %v459, %v478
    %v480 = vrot.slane %v463, 4
    %v481 = vsel %vm212, %v480, %v439
    %v482 = vrot.slane %v439, 4
    %v483 = vsel %vm212, %v463, %v482
    %v484 = vrot.slane %v471, 4
    %v485 = vsel %vm212, %v484, %v447
    %v486 = vrot.slane %v447, 4
    %v487 = vsel %vm212, %v471, %v486
    %v488 = vrot.slane %v475, 4
    %v489 = vsel %vm212, %v488, %v451
    %v490 = vrot.slane %v451, 4
    %v491 = vsel %vm212, %v475, %v490
    %v492 = vrot.slane %v202, 4
    %v493 = vsel %vm212, %v492, %v190
    %v494 = vrot.slane %v190, 4
    %v495 = vsel %vm212, %v202, %v494
    %v497 = vunpack.c.l.s4 1983009808
    %v498 = vunpack.c.0.s8 %v497
    %v499 = vperm.slane %v493, %v498
    %v501 = vunpack.c.l.s4 1983009808
    %v502 = vunpack.c.0.s8 %v501
    %v503 = vperm.slane %v495, %v502
    %v504 = vrot.slane %v208, 4
    %v505 = vsel %vm212, %v504, %v196
    %v506 = vrot.slane %v196, 4
    %v507 = vsel %vm212, %v208, %v506
    %v509 = vunpack.c.l.s4 1983009808
    %v510 = vunpack.c.0.s8 %v509
    %v511 = vperm.slane %v505, %v510
    %v513 = vunpack.c.l.s4 1983009808
    %v514 = vunpack.c.0.s8 %v513
    %v515 = vperm.slane %v507, %v514
    %v516 = vrot.slane %v511, 4
    %v517 = vsel %vm212, %v516, %v499
    %v518 = vrot.slane %v499, 4
    %v519 = vsel %vm212, %v511, %v518
    %v521 = vunpack.c.l.s4 1934713408
    %v522 = vunpack.c.0.s8 %v521
    %v523 = vperm.slane %v517, %v522
    %v525 = vunpack.c.l.s4 1934713408
    %v526 = vunpack.c.0.s8 %v525
    %v527 = vperm.slane %v519, %v526
    %v528 = vrot.slane %v515, 4
    %v529 = vsel %vm212, %v528, %v503
    %v530 = vrot.slane %v503, 4
    %v531 = vsel %vm212, %v515, %v530
    %v533 = vunpack.c.l.s4 1934713408
    %v534 = vunpack.c.0.s8 %v533
    %v535 = vperm.slane %v529, %v534
    %v537 = vunpack.c.l.s4 1934713408
    %v538 = vunpack.c.0.s8 %v537
    %v539 = vperm.slane %v531, %v538
    %v540 = vrot.slane %v523, 4
    %v541 = vsel %vm212, 0.0, %v540
    %v542 = vrot.slane %v527, 4
    %v543 = vsel %vm212, 0.0, %v542
    %v544 = vrot.slane %v535, 4
    %v545 = vsel %vm212, 0.0, %v544
    %v546 = vrot.slane %v539, 4
    %v547 = vsel %vm212, 0.0, %v546
    %v548 = vlaneseq
    %v549 = vshrl.u32 %v548, 7
    %v550 = vlaneseq
    %v551 = vand.u32 %v550, 127
    %vm552 = vcmp.ge.s32.totalorder %v549, %v551
    %v553 = vrot.slane %v313, 4
    %v554 = vsel %vm212, %v553, %v309
    %v555 = vrot.slane %v309, 4
    %v556 = vsel %vm212, %v313, %v555
    %v558 = vunpack.c.l.s4 1983009808
    %v559 = vunpack.c.0.s8 %v558
    %v560 = vperm.slane %v554, %v559
    %v562 = vunpack.c.l.s4 1983009808
    %v563 = vunpack.c.0.s8 %v562
    %v564 = vperm.slane %v556, %v563
    %v565 = vrot.slane %v315, 4
    %v566 = vsel %vm212, %v565, %v311
    %v567 = vrot.slane %v311, 4
    %v568 = vsel %vm212, %v315, %v567
    %v570 = vunpack.c.l.s4 1983009808
    %v571 = vunpack.c.0.s8 %v570
    %v572 = vperm.slane %v566, %v571
    %v574 = vunpack.c.l.s4 1983009808
    %v575 = vunpack.c.0.s8 %v574
    %v576 = vperm.slane %v568, %v575
    %v577 = vrot.slane %v321, 4
    %v578 = vsel %vm212, %v577, %v317
    %v579 = vrot.slane %v317, 4
    %v580 = vsel %vm212, %v321, %v579
    %v582 = vunpack.c.l.s4 1983009808
    %v583 = vunpack.c.0.s8 %v582
    %v584 = vperm.slane %v578, %v583
    %v586 = vunpack.c.l.s4 1983009808
    %v587 = vunpack.c.0.s8 %v586
    %v588 = vperm.slane %v580, %v587
    %v589 = vrot.slane %v323, 4
    %v590 = vsel %vm212, %v589, %v319
    %v591 = vrot.slane %v319, 4
    %v592 = vsel %vm212, %v323, %v591
    %v594 = vunpack.c.l.s4 1983009808
    %v595 = vunpack.c.0.s8 %v594
    %v596 = vperm.slane %v590, %v595
    %v598 = vunpack.c.l.s4 1983009808
    %v599 = vunpack.c.0.s8 %v598
    %v600 = vperm.slane %v592, %v599
    %v601 = vrot.slane %v572, 4
    %v602 = vsel %vm212, %v601, %v560
    %v603 = vrot.slane %v560, 4
    %v604 = vsel %vm212, %v572, %v603
    %v606 = vunpack.c.l.s4 1934713408
    %v607 = vunpack.c.0.s8 %v606
    %v608 = vperm.slane %v602, %v607
    %v610 = vunpack.c.l.s4 1934713408
    %v611 = vunpack.c.0.s8 %v610
    %v612 = vperm.slane %v604, %v611
    %v613 = vrot.slane %v576, 4
    %v614 = vsel %vm212, %v613, %v564
    %v615 = vrot.slane %v564, 4
    %v616 = vsel %vm212, %v576, %v615
    %v618 = vunpack.c.l.s4 1934713408
    %v619 = vunpack.c.0.s8 %v618
    %v620 = vperm.slane %v614, %v619
    %v622 = vunpack.c.l.s4 1934713408
    %v623 = vunpack.c.0.s8 %v622
    %v624 = vperm.slane %v616, %v623
    %v625 = vrot.slane %v596, 4
    %v626 = vsel %vm212, %v625, %v584
    %v627 = vrot.slane %v584, 4
    %v628 = vsel %vm212, %v596, %v627
    %v630 = vunpack.c.l.s4 1934713408
    %v631 = vunpack.c.0.s8 %v630
    %v632 = vperm.slane %v626, %v631
    %v634 = vunpack.c.l.s4 1934713408
    %v635 = vunpack.c.0.s8 %v634
    %v636 = vperm.slane %v628, %v635
    %v637 = vrot.slane %v600, 4
    %v638 = vsel %vm212, %v637, %v588
    %v639 = vrot.slane %v588, 4
    %v640 = vsel %vm212, %v600, %v639
    %v642 = vunpack.c.l.s4 1934713408
    %v643 = vunpack.c.0.s8 %v642
    %v644 = vperm.slane %v638, %v643
    %v646 = vunpack.c.l.s4 1934713408
    %v647 = vunpack.c.0.s8 %v646
    %v648 = vperm.slane %v640, %v647
    %v649 = vrot.slane %v632, 4
    %v650 = vsel %vm212, %v649, %v608
    %v651 = vrot.slane %v608, 4
    %v652 = vsel %vm212, %v632, %v651
    %v653 = vrot.slane %v636, 4
    %v654 = vsel %vm212, %v653, %v612
    %v655 = vrot.slane %v612, 4
    %v656 = vsel %vm212, %v636, %v655
    %v657 = vrot.slane %v644, 4
    %v658 = vsel %vm212, %v657, %v620
    %v659 = vrot.slane %v620, 4
    %v660 = vsel %vm212, %v644, %v659
    %v661 = vrot.slane %v648, 4
    %v662 = vsel %vm212, %v661, %v624
    %v663 = vrot.slane %v624, 4
    %v664 = vsel %vm212, %v648, %v663
    %v665 = vsel %vm212, %v374, %v355
    %v667 = vunpack.c.l.s4 1983009808
    %v668 = vunpack.c.0.s8 %v667
    %v669 = vperm.slane %v665, %v668
    %v670 = vrot.slane %v375, 4
    %v671 = vsel %vm212, %v670, %v373
    %v673 = vunpack.c.l.s4 1983009808
    %v674 = vunpack.c.0.s8 %v673
    %v675 = vperm.slane %v671, %v674
    %v676 = vsel %vm212, %v378, %v367
    %v678 = vunpack.c.l.s4 1983009808
    %v679 = vunpack.c.0.s8 %v678
    %v680 = vperm.slane %v676, %v679
    %v681 = vrot.slane %v379, 4
    %v682 = vsel %vm212, %v681, %v377
    %v684 = vunpack.c.l.s4 1983009808
    %v685 = vunpack.c.0.s8 %v684
    %v686 = vperm.slane %v682, %v685
    %v687 = vrot.slane %v675, 4
    %v688 = vsel %vm212, %v687, %v669
    %v689 = vrot.slane %v669, 4
    %v690 = vsel %vm212, %v675, %v689
    %v692 = vunpack.c.l.s4 1934713408
    %v693 = vunpack.c.0.s8 %v692
    %v694 = vperm.slane %v688, %v693
    %v696 = vunpack.c.l.s4 1934713408
    %v697 = vunpack.c.0.s8 %v696
    %v698 = vperm.slane %v690, %v697
    %v699 = vrot.slane %v686, 4
    %v700 = vsel %vm212, %v699, %v680
    %v701 = vrot.slane %v680, 4
    %v702 = vsel %vm212, %v686, %v701
    %v704 = vunpack.c.l.s4 1934713408
    %v705 = vunpack.c.0.s8 %v704
    %v706 = vperm.slane %v700, %v705
    %v708 = vunpack.c.l.s4 1934713408
    %v709 = vunpack.c.0.s8 %v708
    %v710 = vperm.slane %v702, %v709
    %v711 = vrot.slane %v706, 4
    %v712 = vsel %vm212, %v711, %v694
    %v713 = vrot.slane %v694, 4
    %v714 = vsel %vm212, %v706, %v713
    %v715 = vrot.slane %v710, 4
    %v716 = vsel %vm212, %v715, %v698
    %v717 = vrot.slane %v698, 4
    %v718 = vsel %vm212, %v710, %v717
    %v719 = vpack.c.bf16 %v650, %v650
    %v720 = vpack.c.bf16 %v652, %v652
    %v721 = vpack.c.bf16 %v654, %v654
    %v722 = vpack.c.bf16 %v656, %v656
    %v723 = vpack.c.bf16 %v658, %v658
    %v724 = vpack.c.bf16 %v660, %v660
    %v725 = vpack.c.bf16 %v662, %v662
    %v726 = vpack.c.bf16 %v664, %v664
    %v727 = vpack.c.bf16 %v712, %v712
    %v728 = vpack.c.bf16 %v714, %v714
    %v729 = vpack.c.bf16 %v716, %v716
    %v730 = vpack.c.bf16 %v718, %v718
    %vm731 = vcmask 64512
    %v733 = vsel %vm731, %v719, 0
    %v736 = vsel %vm731, %v723, 0
    %738 = vmatpush.bf16.xpose.msra.mxu0 0
    %739 = vmatpush.bf16.xpose.msra.mxu0 0
    %740 = vmatpush.bf16.xpose.msra.mxu0 0
    %741 = vmatpush.bf16.xpose.msra.mxu0 0
    %742 = vmatpush.bf16.xpose.msra.mxu0 0
    %743 = vmatpush.bf16.xpose.msra.mxu0 0
    %744 = vmatpush.bf16.xpose.msra.mxu0 0
    %745 = vmatpush.bf16.xpose.msra.mxu0 %v736
    %746 = vmatmul.bf16.gmra.mxu0 %v733
    %v747 = vpop.f32.mrf.mxu0
    %v748 = vadd.f32 0.0, %v747
    %v749 = vpop.f32.mrf.mxu0
    %750 = vdwg.mxu0
    %v752 = vsel %vm731, %v720, 0
    %v755 = vsel %vm731, %v724, 0
    %757 = vmatpush.bf16.xpose.msra.mxu0 0
    %758 = vmatpush.bf16.xpose.msra.mxu0 0
    %759 = vmatpush.bf16.xpose.msra.mxu0 0
    %760 = vmatpush.bf16.xpose.msra.mxu0 0
    %761 = vmatpush.bf16.xpose.msra.mxu0 0
    %762 = vmatpush.bf16.xpose.msra.mxu0 0
    %763 = vmatpush.bf16.xpose.msra.mxu0 0
    %764 = vmatpush.bf16.xpose.msra.mxu0 %v755
    %765 = vmatmul.bf16.gmra.mxu0 %v752
    %v766 = vpop.f32.mrf.mxu0
    %v767 = vadd.f32 0.0, %v766
    %v768 = vpop.f32.mrf.mxu0
    %769 = vdwg.mxu0
    %v771 = vsel %vm731, %v721, 0
    %v774 = vsel %vm731, %v725, 0
    %776 = vmatpush.bf16.xpose.msra.mxu0 0
    %777 = vmatpush.bf16.xpose.msra.mxu0 0
    %778 = vmatpush.bf16.xpose.msra.mxu0 0
    %779 = vmatpush.bf16.xpose.msra.mxu0 0
    %780 = vmatpush.bf16.xpose.msra.mxu0 0
    %781 = vmatpush.bf16.xpose.msra.mxu0 0
    %782 = vmatpush.bf16.xpose.msra.mxu0 0
    %783 = vmatpush.bf16.xpose.msra.mxu0 %v774
    %784 = vmatmul.bf16.gmra.mxu0 %v771
    %v785 = vpop.f32.mrf.mxu0
    %v786 = vadd.f32 0.0, %v785
    %v787 = vpop.f32.mrf.mxu0
    %788 = vdwg.mxu0
    %v790 = vsel %vm731, %v722, 0
    %v793 = vsel %vm731, %v726, 0
    %795 = vmatpush.bf16.xpose.msra.mxu0 0
    %796 = vmatpush.bf16.xpose.msra.mxu0 0
    %797 = vmatpush.bf16.xpose.msra.mxu0 0
    %798 = vmatpush.bf16.xpose.msra.mxu0 0
    %799 = vmatpush.bf16.xpose.msra.mxu0 0
    %800 = vmatpush.bf16.xpose.msra.mxu0 0
    %801 = vmatpush.bf16.xpose.msra.mxu0 0
    %802 = vmatpush.bf16.xpose.msra.mxu0 %v793
    %803 = vmatmul.bf16.gmra.mxu0 %v790
    %v804 = vpop.f32.mrf.mxu0
    %v805 = vadd.f32 0.0, %v804
    %v806 = vpop.f32.mrf.mxu0
    %807 = vdwg.mxu0
    %v808 = vmul.f32 %v748, 0.17677669
    %v809 = vmul.f32 %v767, 0.17677669
    %v810 = vmul.f32 %v786, 0.17677669
    %v811 = vmul.f32 %v805, 0.17677669
    %v812 = vsel %vm552, 1, 0
    %vm813 = vcmp.eq.s32.totalorder %v812, 1
    %v814 = vsel %vm813, %v808, -1e+30
    %v815 = vsel %vm813, %v809, -1e+30
    %v816 = vsel %vm813, %v810, -1e+30
    %v817 = vsel %vm813, %v811, -1e+30
    %v818 = vsel %vm731, %v814, -inf
    %819 = vmax.xlane.f32.xlu0 %v818
    %v820 = vpop.xlane.xlu0 %819
    %v821 = vsel %vm731, %v815, -inf
    %822 = vmax.xlane.f32.xlu0 %v821
    %v823 = vpop.xlane.xlu0 %822
    %v824 = vsel %vm731, %v816, -inf
    %825 = vmax.xlane.f32.xlu0 %v824
    %v826 = vpop.xlane.xlu0 %825
    %v827 = vsel %vm731, %v817, -inf
    %828 = vmax.xlane.f32.xlu0 %v827
    %v829 = vpop.xlane.xlu0 %828
    %v830 = vsub.f32 %v814, %v820
    %v831 = vsub.f32 %v815, %v823
    %v832 = vsub.f32 %v816, %v826
    %v833 = vsub.f32 %v817, %v829
    %v834 = vmul.f32 %v830, 1.442695
    %v835 = vpow.pop %v834
    %v836 = vmul.f32 %v831, 1.442695
    %v837 = vpow.pop %v836
    %v838 = vmul.f32 %v832, 1.442695
    %v839 = vpow.pop %v838
    %v840 = vmul.f32 %v833, 1.442695
    %v841 = vpow.pop %v840
    %v842 = vsel %vm731, %v835, 0.0
    %843 = vadd.xlane.f32.xlu0 %v842
    %v844 = vpop.xlane.xlu0 %843
    %v845 = vsel %vm731, %v837, 0.0
    %846 = vadd.xlane.f32.xlu0 %v845
    %v847 = vpop.xlane.xlu0 %846
    %v848 = vsel %vm731, %v839, 0.0
    %849 = vadd.xlane.f32.xlu0 %v848
    %v850 = vpop.xlane.xlu0 %849
    %v851 = vsel %vm731, %v841, 0.0
    %852 = vadd.xlane.f32.xlu0 %v851
    %v853 = vpop.xlane.xlu0 %852
    %v854 = vrcp.pop %v844
    %v855 = vrcp.pop %v847
    %v856 = vrcp.pop %v850
    %v857 = vrcp.pop %v853
    %v858 = vmul.f32 %v835, %v854
    %v859 = vmul.f32 %v837, %v855
    %v860 = vmul.f32 %v839, %v856
    %v861 = vmul.f32 %v841, %v857
    %v862 = vpack.c.bf16 %v858, %v858
    %v863 = vpack.c.bf16 %v859, %v859
    %v864 = vpack.c.bf16 %v860, %v860
    %v865 = vpack.c.bf16 %v861, %v861
    %v867 = vsel %vm731, %v862, 0
    %vm869 = vcmask 1043456
    %v871 = vsel %vm869, %v727, 0
    %873 = vmatpush.bf16.msra.mxu0 0
    %874 = vmatpush.bf16.msra.mxu0 0
    %875 = vmatpush.bf16.msra.mxu0 0
    %876 = vmatpush.bf16.msra.mxu0 0
    %877 = vmatpush.bf16.msra.mxu0 0
    %878 = vmatpush.bf16.msra.mxu0 0
    %879 = vmatpush.bf16.msra.mxu0 0
    %880 = vmatpush.bf16.msra.mxu0 %v871
    %881 = vmatmul.bf16.gmra.mxu0 %v867
    %v882 = vpop.f32.mrf.mxu0
    %v883 = vadd.f32 0.0, %v882
    %v884 = vpop.f32.mrf.mxu0
    %885 = vdwg.mxu0
    %v887 = vsel %vm731, %v863, 0
    %v890 = vsel %vm869, %v728, 0
    %892 = vmatpush.bf16.msra.mxu0 0
    %893 = vmatpush.bf16.msra.mxu0 0
    %894 = vmatpush.bf16.msra.mxu0 0
    %895 = vmatpush.bf16.msra.mxu0 0
    %896 = vmatpush.bf16.msra.mxu0 0
    %897 = vmatpush.bf16.msra.mxu0 0
    %898 = vmatpush.bf16.msra.mxu0 0
    %899 = vmatpush.bf16.msra.mxu0 %v890
    %900 = vmatmul.bf16.gmra.mxu0 %v887
    %v901 = vpop.f32.mrf.mxu0
    %v902 = vadd.f32 0.0, %v901
    %v903 = vpop.f32.mrf.mxu0
    %904 = vdwg.mxu0
    %v906 = vsel %vm731, %v864, 0
    %v909 = vsel %vm869, %v729, 0
    %911 = vmatpush.bf16.msra.mxu0 0
    %912 = vmatpush.bf16.msra.mxu0 0
    %913 = vmatpush.bf16.msra.mxu0 0
    %914 = vmatpush.bf16.msra.mxu0 0
    %915 = vmatpush.bf16.msra.mxu0 0
    %916 = vmatpush.bf16.msra.mxu0 0
    %917 = vmatpush.bf16.msra.mxu0 0
    %918 = vmatpush.bf16.msra.mxu0 %v909
    %919 = vmatmul.bf16.gmra.mxu0 %v906
    %v920 = vpop.f32.mrf.mxu0
    %v921 = vadd.f32 0.0, %v920
    %v922 = vpop.f32.mrf.mxu0
    %923 = vdwg.mxu0
    %v925 = vsel %vm731, %v865, 0
    %v928 = vsel %vm869, %v730, 0
    %930 = vmatpush.bf16.msra.mxu0 0
    %931 = vmatpush.bf16.msra.mxu0 0
    %932 = vmatpush.bf16.msra.mxu0 0
    %933 = vmatpush.bf16.msra.mxu0 0
    %934 = vmatpush.bf16.msra.mxu0 0
    %935 = vmatpush.bf16.msra.mxu0 0
    %936 = vmatpush.bf16.msra.mxu0 0
    %937 = vmatpush.bf16.msra.mxu0 %v928
    %938 = vmatmul.bf16.gmra.mxu0 %v925
    %v939 = vpop.f32.mrf.mxu0
    %v940 = vadd.f32 0.0, %v939
    %v941 = vpop.f32.mrf.mxu0
    %942 = vdwg.mxu0
    %v943 = vrot.slane %v921, 4
    %v944 = vsel %vm212, %v943, %v883
    %v945 = vrot.slane %v883, 4
    %v946 = vsel %vm212, %v921, %v945
    %v948 = vunpack.c.l.s4 1983009808
    %v949 = vunpack.c.0.s8 %v948
    %v950 = vperm.slane %v944, %v949
    %v952 = vunpack.c.l.s4 1983009808
    %v953 = vunpack.c.0.s8 %v952
    %v954 = vperm.slane %v946, %v953
    %v955 = vrot.slane %v940, 4
    %v956 = vsel %vm212, %v955, %v902
    %v957 = vrot.slane %v902, 4
    %v958 = vsel %vm212, %v940, %v957
    %v960 = vunpack.c.l.s4 1983009808
    %v961 = vunpack.c.0.s8 %v960
    %v962 = vperm.slane %v956, %v961
    %v964 = vunpack.c.l.s4 1983009808
    %v965 = vunpack.c.0.s8 %v964
    %v966 = vperm.slane %v958, %v965
    %v967 = vrot.slane %v962, 4
    %v968 = vsel %vm212, %v967, %v950
    %v969 = vrot.slane %v950, 4
    %v970 = vsel %vm212, %v962, %v969
    %v972 = vunpack.c.l.s4 1934713408
    %v973 = vunpack.c.0.s8 %v972
    %v974 = vperm.slane %v968, %v973
    %v976 = vunpack.c.l.s4 1934713408
    %v977 = vunpack.c.0.s8 %v976
    %v978 = vperm.slane %v970, %v977
    %v979 = vrot.slane %v966, 4
    %v980 = vsel %vm212, %v979, %v954
    %v981 = vrot.slane %v954, 4
    %v982 = vsel %vm212, %v966, %v981
    %v984 = vunpack.c.l.s4 1934713408
    %v985 = vunpack.c.0.s8 %v984
    %v986 = vperm.slane %v980, %v985
    %v988 = vunpack.c.l.s4 1934713408
    %v989 = vunpack.c.0.s8 %v988
    %v990 = vperm.slane %v982, %v989
    %v991 = vrot.slane %v974, 4
    %v992 = vsel %vm212, 0.0, %v991
    %v993 = vrot.slane %v978, 4
    %v994 = vsel %vm212, 0.0, %v993
    %v995 = vrot.slane %v986, 4
    %v996 = vsel %vm212, 0.0, %v995
    %v997 = vrot.slane %v990, 4
    %v998 = vsel %vm212, 0.0, %v997
    %v999 = vsel %vm212, %v993, %v974
    %v1001 = vunpack.c.l.s4 1983009808
    %v1002 = vunpack.c.0.s8 %v1001
    %v1003 = vperm.slane %v999, %v1002
    %v1004 = vrot.slane %v994, 4
    %v1005 = vsel %vm212, %v1004, %v992
    %v1007 = vunpack.c.l.s4 1983009808
    %v1008 = vunpack.c.0.s8 %v1007
    %v1009 = vperm.slane %v1005, %v1008
    %v1010 = vsel %vm212, %v997, %v986
    %v1012 = vunpack.c.l.s4 1983009808
    %v1013 = vunpack.c.0.s8 %v1012
    %v1014 = vperm.slane %v1010, %v1013
    %v1015 = vrot.slane %v998, 4
    %v1016 = vsel %vm212, %v1015, %v996
    %v1018 = vunpack.c.l.s4 1983009808
    %v1019 = vunpack.c.0.s8 %v1018
    %v1020 = vperm.slane %v1016, %v1019
    %v1021 = vrot.slane %v1009, 4
    %v1022 = vsel %vm212, %v1021, %v1003
    %v1023 = vrot.slane %v1003, 4
    %v1024 = vsel %vm212, %v1009, %v1023
    %v1026 = vunpack.c.l.s4 1934713408
    %v1027 = vunpack.c.0.s8 %v1026
    %v1028 = vperm.slane %v1022, %v1027
    %v1030 = vunpack.c.l.s4 1934713408
    %v1031 = vunpack.c.0.s8 %v1030
    %v1032 = vperm.slane %v1024, %v1031
    %v1033 = vrot.slane %v1020, 4
    %v1034 = vsel %vm212, %v1033, %v1014
    %v1035 = vrot.slane %v1014, 4
    %v1036 = vsel %vm212, %v1020, %v1035
    %v1038 = vunpack.c.l.s4 1934713408
    %v1039 = vunpack.c.0.s8 %v1038
    %v1040 = vperm.slane %v1034, %v1039
    %v1042 = vunpack.c.l.s4 1934713408
    %v1043 = vunpack.c.0.s8 %v1042
    %v1044 = vperm.slane %v1036, %v1043
    %v1045 = vrot.slane %v1040, 4
    %v1046 = vsel %vm212, %v1045, %v1028
    %v1047 = vrot.slane %v1028, 4
    %v1048 = vsel %vm212, %v1040, %v1047
    %v1049 = vrot.slane %v1044, 4
    %v1050 = vsel %vm212, %v1049, %v1032
    %v1051 = vrot.slane %v1032, 4
    %v1052 = vsel %vm212, %v1044, %v1051
    %1054 = vrot.lane.b32.xlu0 %v1048, 8
    %v1055 = vpop.permute.xlu0 %1054
    %1058 = vrot.lane.b32.xlu0 %v1050, 16
    %v1059 = vpop.permute.xlu0 %1058
    %1062 = vrot.lane.b32.xlu0 %v1052, 24
    %v1063 = vpop.permute.xlu0 %1062
    %v1065 = vsel %vm731, %v1046, %v1055
    %vm1066 = vcmask 130048
    %v1067 = vsel %vm1066, %v1065, %v1059
    %vm1068 = vcmask 195584
    %v1069 = vsel %vm1068, %v1067, %v1063
    %1070 = vst.msk [vmem:[#allocation2] sm:$0xff] %vm47, %v1069
    %v1071 = vrot.slane %v481, 4
    %v1072 = vsel %vm212, %v1071, %v477
    %v1073 = vrot.slane %v477, 4
    %v1074 = vsel %vm212, %v481, %v1073
    %v1076 = vunpack.c.l.s4 1983009808
    %v1077 = vunpack.c.0.s8 %v1076
    %v1078 = vperm.slane %v1072, %v1077
    %v1080 = vunpack.c.l.s4 1983009808
    %v1081 = vunpack.c.0.s8 %v1080
    %v1082 = vperm.slane %v1074, %v1081
    %v1083 = vrot.slane %v483, 4
    %v1084 = vsel %vm212, %v1083, %v479
    %v1085 = vrot.slane %v479, 4
    %v1086 = vsel %vm212, %v483, %v1085
    %v1088 = vunpack.c.l.s4 1983009808
    %v1089 = vunpack.c.0.s8 %v1088
    %v1090 = vperm.slane %v1084, %v1089
    %v1092 = vunpack.c.l.s4 1983009808
    %v1093 = vunpack.c.0.s8 %v1092
    %v1094 = vperm.slane %v1086, %v1093
    %v1095 = vrot.slane %v489, 4
    %v1096 = vsel %vm212, %v1095, %v485
    %v1097 = vrot.slane %v485, 4
    %v1098 = vsel %vm212, %v489, %v1097
    %v1100 = vunpack.c.l.s4 1983009808
    %v1101 = vunpack.c.0.s8 %v1100
    %v1102 = vperm.slane %v1096, %v1101
    %v1104 = vunpack.c.l.s4 1983009808
    %v1105 = vunpack.c.0.s8 %v1104
    %v1106 = vperm.slane %v1098, %v1105
    %v1107 = vrot.slane %v491, 4
    %v1108 = vsel %vm212, %v1107, %v487
    %v1109 = vrot.slane %v487, 4
    %v1110 = vsel %vm212, %v491, %v1109
    %v1112 = vunpack.c.l.s4 1983009808
    %v1113 = vunpack.c.0.s8 %v1112
    %v1114 = vperm.slane %v1108, %v1113
    %v1116 = vunpack.c.l.s4 1983009808
    %v1117 = vunpack.c.0.s8 %v1116
    %v1118 = vperm.slane %v1110, %v1117
    %v1119 = vrot.slane %v1090, 4
    %v1120 = vsel %vm212, %v1119, %v1078
    %v1121 = vrot.slane %v1078, 4
    %v1122 = vsel %vm212, %v1090, %v1121
    %v1124 = vunpack.c.l.s4 1934713408
    %v1125 = vunpack.c.0.s8 %v1124
    %v1126 = vperm.slane %v1120, %v1125
    %v1128 = vunpack.c.l.s4 1934713408
    %v1129 = vunpack.c.0.s8 %v1128
    %v1130 = vperm.slane %v1122, %v1129
    %v1131 = vrot.slane %v1094, 4
    %v1132 = vsel %vm212, %v1131, %v1082
    %v1133 = vrot.slane %v1082, 4
    %v1134 = vsel %vm212, %v1094, %v1133
    %v1136 = vunpack.c.l.s4 1934713408
    %v1137 = vunpack.c.0.s8 %v1136
    %v1138 = vperm.slane %v1132, %v1137
    %v1140 = vunpack.c.l.s4 1934713408
    %v1141 = vunpack.c.0.s8 %v1140
    %v1142 = vperm.slane %v1134, %v1141
    %v1143 = vrot.slane %v1114, 4
    %v1144 = vsel %vm212, %v1143, %v1102
    %v1145 = vrot.slane %v1102, 4
    %v1146 = vsel %vm212, %v1114, %v1145
    %v1148 = vunpack.c.l.s4 1934713408
    %v1149 = vunpack.c.0.s8 %v1148
    %v1150 = vperm.slane %v1144, %v1149
    %v1152 = vunpack.c.l.s4 1934713408
    %v1153 = vunpack.c.0.s8 %v1152
    %v1154 = vperm.slane %v1146, %v1153
    %v1155 = vrot.slane %v1118, 4
    %v1156 = vsel %vm212, %v1155, %v1106
    %v1157 = vrot.slane %v1106, 4
    %v1158 = vsel %vm212, %v1118, %v1157
    %v1160 = vunpack.c.l.s4 1934713408
    %v1161 = vunpack.c.0.s8 %v1160
    %v1162 = vperm.slane %v1156, %v1161
    %v1164 = vunpack.c.l.s4 1934713408
    %v1165 = vunpack.c.0.s8 %v1164
    %v1166 = vperm.slane %v1158, %v1165
    %v1167 = vrot.slane %v1150, 4
    %v1168 = vsel %vm212, %v1167, %v1126
    %v1169 = vrot.slane %v1126, 4
    %v1170 = vsel %vm212, %v1150, %v1169
    %v1171 = vrot.slane %v1154, 4
    %v1172 = vsel %vm212, %v1171, %v1130
    %v1173 = vrot.slane %v1130, 4
    %v1174 = vsel %vm212, %v1154, %v1173
    %v1175 = vrot.slane %v1162, 4
    %v1176 = vsel %vm212, %v1175, %v1138
    %v1177 = vrot.slane %v1138, 4
    %v1178 = vsel %vm212, %v1162, %v1177
    %v1179 = vrot.slane %v1166, 4
    %v1180 = vsel %vm212, %v1179, %v1142
    %v1181 = vrot.slane %v1142, 4
    %v1182 = vsel %vm212, %v1166, %v1181
    %v1183 = vsel %vm212, %v542, %v523
    %v1185 = vunpack.c.l.s4 1983009808
    %v1186 = vunpack.c.0.s8 %v1185
    %v1187 = vperm.slane %v1183, %v1186
    %v1188 = vrot.slane %v543, 4
    %v1189 = vsel %vm212, %v1188, %v541
    %v1191 = vunpack.c.l.s4 1983009808
    %v1192 = vunpack.c.0.s8 %v1191
    %v1193 = vperm.slane %v1189, %v1192
    %v1194 = vsel %vm212, %v546, %v535
    %v1196 = vunpack.c.l.s4 1983009808
    %v1197 = vunpack.c.0.s8 %v1196
    %v1198 = vperm.slane %v1194, %v1197
    %v1199 = vrot.slane %v547, 4
    %v1200 = vsel %vm212, %v1199, %v545
    %v1202 = vunpack.c.l.s4 1983009808
    %v1203 = vunpack.c.0.s8 %v1202
    %v1204 = vperm.slane %v1200, %v1203
    %v1205 = vrot.slane %v1193, 4
    %v1206 = vsel %vm212, %v1205, %v1187
    %v1207 = vrot.slane %v1187, 4
    %v1208 = vsel %vm212, %v1193, %v1207
    %v1210 = vunpack.c.l.s4 1934713408
    %v1211 = vunpack.c.0.s8 %v1210
    %v1212 = vperm.slane %v1206, %v1211
    %v1214 = vunpack.c.l.s4 1934713408
    %v1215 = vunpack.c.0.s8 %v1214
    %v1216 = vperm.slane %v1208, %v1215
    %v1217 = vrot.slane %v1204, 4
    %v1218 = vsel %vm212, %v1217, %v1198
    %v1219 = vrot.slane %v1198, 4
    %v1220 = vsel %vm212, %v1204, %v1219
    %v1222 = vunpack.c.l.s4 1934713408
    %v1223 = vunpack.c.0.s8 %v1222
    %v1224 = vperm.slane %v1218, %v1223
    %v1226 = vunpack.c.l.s4 1934713408
    %v1227 = vunpack.c.0.s8 %v1226
    %v1228 = vperm.slane %v1220, %v1227
    %v1229 = vrot.slane %v1224, 4
    %v1230 = vsel %vm212, %v1229, %v1212
    %v1231 = vrot.slane %v1212, 4
    %v1232 = vsel %vm212, %v1224, %v1231
    %v1233 = vrot.slane %v1228, 4
    %v1234 = vsel %vm212, %v1233, %v1216
    %v1235 = vrot.slane %v1216, 4
    %v1236 = vsel %vm212, %v1228, %v1235
    %v1237 = vpack.c.bf16 %v1168, %v1168
    %v1238 = vpack.c.bf16 %v1170, %v1170
    %v1239 = vpack.c.bf16 %v1172, %v1172
    %v1240 = vpack.c.bf16 %v1174, %v1174
    %v1241 = vpack.c.bf16 %v1176, %v1176
    %v1242 = vpack.c.bf16 %v1178, %v1178
    %v1243 = vpack.c.bf16 %v1180, %v1180
    %v1244 = vpack.c.bf16 %v1182, %v1182
    %v1245 = vpack.c.bf16 %v1230, %v1230
    %v1246 = vpack.c.bf16 %v1232, %v1232
    %v1247 = vpack.c.bf16 %v1234, %v1234
    %v1248 = vpack.c.bf16 %v1236, %v1236
    %v1250 = vsel %vm731, %v1237, 0
    %v1253 = vsel %vm731, %v1241, 0
    %1255 = vmatpush.bf16.xpose.msra.mxu0 0
    %1256 = vmatpush.bf16.xpose.msra.mxu0 0
    %1257 = vmatpush.bf16.xpose.msra.mxu0 0
    %1258 = vmatpush.bf16.xpose.msra.mxu0 0
    %1259 = vmatpush.bf16.xpose.msra.mxu0 0
    %1260 = vmatpush.bf16.xpose.msra.mxu0 0
    %1261 = vmatpush.bf16.xpose.msra.mxu0 0
    %1262 = vmatpush.bf16.xpose.msra.mxu0 %v1253
    %1263 = vmatmul.bf16.gmra.mxu0 %v1250
    %v1264 = vpop.f32.mrf.mxu0
    %v1265 = vadd.f32 0.0, %v1264
    %v1266 = vpop.f32.mrf.mxu0
    %1267 = vdwg.mxu0
    %v1269 = vsel %vm731, %v1238, 0
    %v1272 = vsel %vm731, %v1242, 0
    %1274 = vmatpush.bf16.xpose.msra.mxu0 0
    %1275 = vmatpush.bf16.xpose.msra.mxu0 0
    %1276 = vmatpush.bf16.xpose.msra.mxu0 0
    %1277 = vmatpush.bf16.xpose.msra.mxu0 0
    %1278 = vmatpush.bf16.xpose.msra.mxu0 0
    %1279 = vmatpush.bf16.xpose.msra.mxu0 0
    %1280 = vmatpush.bf16.xpose.msra.mxu0 0
    %1281 = vmatpush.bf16.xpose.msra.mxu0 %v1272
    %1282 = vmatmul.bf16.gmra.mxu0 %v1269
    %v1283 = vpop.f32.mrf.mxu0
    %v1284 = vadd.f32 0.0, %v1283
    %v1285 = vpop.f32.mrf.mxu0
    %1286 = vdwg.mxu0
    %v1288 = vsel %vm731, %v1239, 0
    %v1291 = vsel %vm731, %v1243, 0
    %1293 = vmatpush.bf16.xpose.msra.mxu0 0
    %1294 = vmatpush.bf16.xpose.msra.mxu0 0
    %1295 = vmatpush.bf16.xpose.msra.mxu0 0
    %1296 = vmatpush.bf16.xpose.msra.mxu0 0
    %1297 = vmatpush.bf16.xpose.msra.mxu0 0
    %1298 = vmatpush.bf16.xpose.msra.mxu0 0
    %1299 = vmatpush.bf16.xpose.msra.mxu0 0
    %1300 = vmatpush.bf16.xpose.msra.mxu0 %v1291
    %1301 = vmatmul.bf16.gmra.mxu0 %v1288
    %v1302 = vpop.f32.mrf.mxu0
    %v1303 = vadd.f32 0.0, %v1302
    %v1304 = vpop.f32.mrf.mxu0
    %1305 = vdwg.mxu0
    %v1307 = vsel %vm731, %v1240, 0
    %v1310 = vsel %vm731, %v1244, 0
    %1312 = vmatpush.bf16.xpose.msra.mxu0 0
    %1313 = vmatpush.bf16.xpose.msra.mxu0 0
    %1314 = vmatpush.bf16.xpose.msra.mxu0 0
    %1315 = vmatpush.bf16.xpose.msra.mxu0 0
    %1316 = vmatpush.bf16.xpose.msra.mxu0 0
    %1317 = vmatpush.bf16.xpose.msra.mxu0 0
    %1318 = vmatpush.bf16.xpose.msra.mxu0 0
    %1319 = vmatpush.bf16.xpose.msra.mxu0 %v1310
    %1320 = vmatmul.bf16.gmra.mxu0 %v1307
    %v1321 = vpop.f32.mrf.mxu0
    %v1322 = vadd.f32 0.0, %v1321
    %v1323 = vpop.f32.mrf.mxu0
    %1324 = vdwg.mxu0
    %v1325 = vmul.f32 %v1265, 0.17677669
    %v1326 = vmul.f32 %v1284, 0.17677669
    %v1327 = vmul.f32 %v1303, 0.17677669
    %v1328 = vmul.f32 %v1322, 0.17677669
    %v1329 = vsel %vm813, %v1325, -1e+30
    %v1330 = vsel %vm813, %v1326, -1e+30
    %v1331 = vsel %vm813, %v1327, -1e+30
    %v1332 = vsel %vm813, %v1328, -1e+30
    %v1333 = vsel %vm731, %v1329, -inf
    %1334 = vmax.xlane.f32.xlu0 %v1333
    %v1335 = vpop.xlane.xlu0 %1334
    %v1336 = vsel %vm731, %v1330, -inf
    %1337 = vmax.xlane.f32.xlu0 %v1336
    %v1338 = vpop.xlane.xlu0 %1337
    %v1339 = vsel %vm731, %v1331, -inf
    %1340 = vmax.xlane.f32.xlu0 %v1339
    %v1341 = vpop.xlane.xlu0 %1340
    %v1342 = vsel %vm731, %v1332, -inf
    %1343 = vmax.xlane.f32.xlu0 %v1342
    %v1344 = vpop.xlane.xlu0 %1343
    %v1345 = vsub.f32 %v1329, %v1335
    %v1346 = vsub.f32 %v1330, %v1338
    %v1347 = vsub.f32 %v1331, %v1341
    %v1348 = vsub.f32 %v1332, %v1344
    %v1349 = vmul.f32 %v1345, 1.442695
    %v1350 = vpow.pop %v1349
    %v1351 = vmul.f32 %v1346, 1.442695
    %v1352 = vpow.pop %v1351
    %v1353 = vmul.f32 %v1347, 1.442695
    %v1354 = vpow.pop %v1353
    %v1355 = vmul.f32 %v1348, 1.442695
    %v1356 = vpow.pop %v1355
    %v1357 = vsel %vm731, %v1350, 0.0
    %1358 = vadd.xlane.f32.xlu0 %v1357
    %v1359 = vpop.xlane.xlu0 %1358
    %v1360 = vsel %vm731, %v1352, 0.0
    %1361 = vadd.xlane.f32.xlu0 %v1360
    %v1362 = vpop.xlane.xlu0 %1361
    %v1363 = vsel %vm731, %v1354, 0.0
    %1364 = vadd.xlane.f32.xlu0 %v1363
    %v1365 = vpop.xlane.xlu0 %1364
    %v1366 = vsel %vm731, %v1356, 0.0
    %1367 = vadd.xlane.f32.xlu0 %v1366
    %v1368 = vpop.xlane.xlu0 %1367
    %v1369 = vrcp.pop %v1359
    %v1370 = vrcp.pop %v1362
    %v1371 = vrcp.pop %v1365
    %v1372 = vrcp.pop %v1368
    %v1373 = vmul.f32 %v1350, %v1369
    %v1374 = vmul.f32 %v1352, %v1370
    %v1375 = vmul.f32 %v1354, %v1371
    %v1376 = vmul.f32 %v1356, %v1372
    %v1377 = vpack.c.bf16 %v1373, %v1373
    %v1378 = vpack.c.bf16 %v1374, %v1374
    %v1379 = vpack.c.bf16 %v1375, %v1375
    %v1380 = vpack.c.bf16 %v1376, %v1376
    %v1382 = vsel %vm731, %v1377, 0
    %v1385 = vsel %vm869, %v1245, 0
    %1387 = vmatpush.bf16.msra.mxu0 0
    %1388 = vmatpush.bf16.msra.mxu0 0
    %1389 = vmatpush.bf16.msra.mxu0 0
    %1390 = vmatpush.bf16.msra.mxu0 0
    %1391 = vmatpush.bf16.msra.mxu0 0
    %1392 = vmatpush.bf16.msra.mxu0 0
    %1393 = vmatpush.bf16.msra.mxu0 0
    %1394 = vmatpush.bf16.msra.mxu0 %v1385
    %1395 = vmatmul.bf16.gmra.mxu0 %v1382
    %v1396 = vpop.f32.mrf.mxu0
    %v1397 = vadd.f32 0.0, %v1396
    %v1398 = vpop.f32.mrf.mxu0
    %1399 = vdwg.mxu0
    %v1401 = vsel %vm731, %v1378, 0
    %v1404 = vsel %vm869, %v1246, 0
    %1406 = vmatpush.bf16.msra.mxu0 0
    %1407 = vmatpush.bf16.msra.mxu0 0
    %1408 = vmatpush.bf16.msra.mxu0 0
    %1409 = vmatpush.bf16.msra.mxu0 0
    %1410 = vmatpush.bf16.msra.mxu0 0
    %1411 = vmatpush.bf16.msra.mxu0 0
    %1412 = vmatpush.bf16.msra.mxu0 0
    %1413 = vmatpush.bf16.msra.mxu0 %v1404
    %1414 = vmatmul.bf16.gmra.mxu0 %v1401
    %v1415 = vpop.f32.mrf.mxu0
    %v1416 = vadd.f32 0.0, %v1415
    %v1417 = vpop.f32.mrf.mxu0
    %1418 = vdwg.mxu0
    %v1420 = vsel %vm731, %v1379, 0
    %v1423 = vsel %vm869, %v1247, 0
    %1425 = vmatpush.bf16.msra.mxu0 0
    %1426 = vmatpush.bf16.msra.mxu0 0
    %1427 = vmatpush.bf16.msra.mxu0 0
    %1428 = vmatpush.bf16.msra.mxu0 0
    %1429 = vmatpush.bf16.msra.mxu0 0
    %1430 = vmatpush.bf16.msra.mxu0 0
    %1431 = vmatpush.bf16.msra.mxu0 0
    %1432 = vmatpush.bf16.msra.mxu0 %v1423
    %1433 = vmatmul.bf16.gmra.mxu0 %v1420
    %v1434 = vpop.f32.mrf.mxu0
    %v1435 = vadd.f32 0.0, %v1434
    %v1436 = vpop.f32.mrf.mxu0
    %1437 = vdwg.mxu0
    %v1439 = vsel %vm731, %v1380, 0
    %v1442 = vsel %vm869, %v1248, 0
    %1444 = vmatpush.bf16.msra.mxu0 0
    %1445 = vmatpush.bf16.msra.mxu0 0
    %1446 = vmatpush.bf16.msra.mxu0 0
    %1447 = vmatpush.bf16.msra.mxu0 0
    %1448 = vmatpush.bf16.msra.mxu0 0
    %1449 = vmatpush.bf16.msra.mxu0 0
    %1450 = vmatpush.bf16.msra.mxu0 0
    %1451 = vmatpush.bf16.msra.mxu0 %v1442
    %1452 = vmatmul.bf16.gmra.mxu0 %v1439
    %v1453 = vpop.f32.mrf.mxu0
    %v1454 = vadd.f32 0.0, %v1453
    %v1455 = vpop.f32.mrf.mxu0
    %1456 = vdwg.mxu0
    %v1457 = vrot.slane %v1435, 4
    %v1458 = vsel %vm212, %v1457, %v1397
    %v1459 = vrot.slane %v1397, 4
    %v1460 = vsel %vm212, %v1435, %v1459
    %v1462 = vunpack.c.l.s4 1983009808
    %v1463 = vunpack.c.0.s8 %v1462
    %v1464 = vperm.slane %v1458, %v1463
    %v1466 = vunpack.c.l.s4 1983009808
    %v1467 = vunpack.c.0.s8 %v1466
    %v1468 = vperm.slane %v1460, %v1467
    %v1469 = vrot.slane %v1454, 4
    %v1470 = vsel %vm212, %v1469, %v1416
    %v1471 = vrot.slane %v1416, 4
    %v1472 = vsel %vm212, %v1454, %v1471
    %v1474 = vunpack.c.l.s4 1983009808
    %v1475 = vunpack.c.0.s8 %v1474
    %v1476 = vperm.slane %v1470, %v1475
    %v1478 = vunpack.c.l.s4 1983009808
    %v1479 = vunpack.c.0.s8 %v1478
    %v1480 = vperm.slane %v1472, %v1479
    %v1481 = vrot.slane %v1476, 4
    %v1482 = vsel %vm212, %v1481, %v1464
    %v1483 = vrot.slane %v1464, 4
    %v1484 = vsel %vm212, %v1476, %v1483
    %v1486 = vunpack.c.l.s4 1934713408
    %v1487 = vunpack.c.0.s8 %v1486
    %v1488 = vperm.slane %v1482, %v1487
    %v1490 = vunpack.c.l.s4 1934713408
    %v1491 = vunpack.c.0.s8 %v1490
    %v1492 = vperm.slane %v1484, %v1491
    %v1493 = vrot.slane %v1480, 4
    %v1494 = vsel %vm212, %v1493, %v1468
    %v1495 = vrot.slane %v1468, 4
    %v1496 = vsel %vm212, %v1480, %v1495
    %v1498 = vunpack.c.l.s4 1934713408
    %v1499 = vunpack.c.0.s8 %v1498
    %v1500 = vperm.slane %v1494, %v1499
    %v1502 = vunpack.c.l.s4 1934713408
    %v1503 = vunpack.c.0.s8 %v1502
    %v1504 = vperm.slane %v1496, %v1503
    %v1505 = vrot.slane %v1488, 4
    %v1506 = vsel %vm212, 0.0, %v1505
    %v1507 = vrot.slane %v1492, 4
    %v1508 = vsel %vm212, 0.0, %v1507
    %v1509 = vrot.slane %v1500, 4
    %v1510 = vsel %vm212, 0.0, %v1509
    %v1511 = vrot.slane %v1504, 4
    %v1512 = vsel %vm212, 0.0, %v1511
    %v1513 = vsel %vm212, %v1507, %v1488
    %v1515 = vunpack.c.l.s4 1983009808
    %v1516 = vunpack.c.0.s8 %v1515
    %v1517 = vperm.slane %v1513, %v1516
    %v1518 = vrot.slane %v1508, 4
    %v1519 = vsel %vm212, %v1518, %v1506
    %v1521 = vunpack.c.l.s4 1983009808
    %v1522 = vunpack.c.0.s8 %v1521
    %v1523 = vperm.slane %v1519, %v1522
    %v1524 = vsel %vm212, %v1511, %v1500
    %v1526 = vunpack.c.l.s4 1983009808
    %v1527 = vunpack.c.0.s8 %v1526
    %v1528 = vperm.slane %v1524, %v1527
    %v1529 = vrot.slane %v1512, 4
    %v1530 = vsel %vm212, %v1529, %v1510
    %v1532 = vunpack.c.l.s4 1983009808
    %v1533 = vunpack.c.0.s8 %v1532
    %v1534 = vperm.slane %v1530, %v1533
    %v1535 = vrot.slane %v1523, 4
    %v1536 = vsel %vm212, %v1535, %v1517
    %v1537 = vrot.slane %v1517, 4
    %v1538 = vsel %vm212, %v1523, %v1537
    %v1540 = vunpack.c.l.s4 1934713408
    %v1541 = vunpack.c.0.s8 %v1540
    %v1542 = vperm.slane %v1536, %v1541
    %v1544 = vunpack.c.l.s4 1934713408
    %v1545 = vunpack.c.0.s8 %v1544
    %v1546 = vperm.slane %v1538, %v1545
    %v1547 = vrot.slane %v1534, 4
    %v1548 = vsel %vm212, %v1547, %v1528
    %v1549 = vrot.slane %v1528, 4
    %v1550 = vsel %vm212, %v1534, %v1549
    %v1552 = vunpack.c.l.s4 1934713408
    %v1553 = vunpack.c.0.s8 %v1552
    %v1554 = vperm.slane %v1548, %v1553
    %v1556 = vunpack.c.l.s4 1934713408
    %v1557 = vunpack.c.0.s8 %v1556
    %v1558 = vperm.slane %v1550, %v1557
    %v1559 = vrot.slane %v1554, 4
    %v1560 = vsel %vm212, %v1559, %v1542
    %v1561 = vrot.slane %v1542, 4
    %v1562 = vsel %vm212, %v1554, %v1561
    %v1563 = vrot.slane %v1558, 4
    %v1564 = vsel %vm212, %v1563, %v1546
    %v1565 = vrot.slane %v1546, 4
    %v1566 = vsel %vm212, %v1558, %v1565
    %1568 = vrot.lane.b32.xlu0 %v1562, 8
    %v1569 = vpop.permute.xlu0 %1568
    %1572 = vrot.lane.b32.xlu0 %v1564, 16
    %v1573 = vpop.permute.xlu0 %1572
    %1576 = vrot.lane.b32.xlu0 %v1566, 24
    %v1577 = vpop.permute.xlu0 %1576
    %v1579 = vsel %vm731, %v1560, %v1569
    %v1580 = vsel %vm1066, %v1579, %v1573
    %v1581 = vsel %vm1068, %v1580, %v1577
    %1582 = vst.msk [vmem:[#allocation2 + $0x8] sm:$0xff] %vm47, %v1581
    %v1583 = vld [vmem:[#allocation2] sm:$0xff]
    %v1584 = vld [vmem:[#allocation2 + $0x8] sm:$0xff]
    %v1585 = vadd.f32 %v43, %v1583
    %v1586 = vadd.f32 %v44, %v1584
    %v1587 = vld [vmem:[%s4] sm:$0x1]
    %v1588 = vld [vmem:[%s5] sm:$0x1]
    %v1589 = vsel %vm47, %v1585, 0.0
    %1590 = vadd.xlane.f32.xlu0 %v1589
    %v1591 = vpop.xlane.xlu0 %1590
    %v1592 = vsel %vm47, %v1586, 0.0
    %1593 = vadd.xlane.f32.xlu0 %v1592
    %v1594 = vpop.xlane.xlu0 %1593
    %v1595 = vmul.f32 %v1591, %v60
    %v1596 = vmul.f32 %v1594, %v60
    %v1597 = vsub.f32 %v1585, %v1595
    %v1598 = vsub.f32 %v1586, %v1596
    %v1599 = vmul.f32 %v1597, %v1597
    %v1600 = vmul.f32 %v1598, %v1598
    %v1601 = vsel %vm47, %v1599, 0.0
    %1602 = vadd.xlane.f32.xlu0 %v1601
    %v1603 = vpop.xlane.xlu0 %1602
    %v1604 = vsel %vm47, %v1600, 0.0
    %1605 = vadd.xlane.f32.xlu0 %v1604
    %v1606 = vpop.xlane.xlu0 %1605
    %v1607 = vmul.f32 %v1603, %v60
    %v1608 = vmul.f32 %v1606, %v60
    %v1609 = vadd.f32 %v1607, 1e-05
    %v1610 = vadd.f32 %v1608, 1e-05
    %v1611 = vrsqrt.pop %v1609
    %v1612 = vmul.f32 %v1611, %v1609
    %v1613 = vmul.f32 %v1612, %v1611
    %v1614 = vmul.f32 0.5, %v1613
    %v1615 = vsub.f32 1.5, %v1614
    %v1616 = vmul.f32 %v1611, %v1615
    %vm1617 = vweird.f32 %v1609
    %vm1618 = vweird.f32 %v1611
    %vm1619 = vmor %vm1617, %vm1618
    %v1620 = vsel %vm1619, %v1611, %v1616
    %v1621 = vrsqrt.pop %v1610
    %v1622 = vmul.f32 %v1621, %v1610
    %v1623 = vmul.f32 %v1622, %v1621
    %v1624 = vmul.f32 0.5, %v1623
    %v1625 = vsub.f32 1.5, %v1624
    %v1626 = vmul.f32 %v1621, %v1625
    %vm1627 = vweird.f32 %v1610
    %vm1628 = vweird.f32 %v1621
    %vm1629 = vmor %vm1627, %vm1628
    %v1630 = vsel %vm1629, %v1621, %v1626
    %v1631 = vmul.f32 %v1597, %v1620
    %v1632 = vmul.f32 %v1598, %v1630
    %v1634 = vperm.slane %v1587, 0
    %v1636 = vmul.f32 %v1631, %v1634
    %v1637 = vmul.f32 %v1632, %v1634
    %v1639 = vperm.slane %v1588, 0
    %v1641 = vadd.f32 %v1636, %v1639
    %v1642 = vadd.f32 %v1637, %v1639
    %v1643 = vpack.c.bf16 %v1642, %v1641
    %v1644 = vld [vmem:[%s6] sm:$0xf]
    %v1645 = vld [vmem:[%s6 + $0x4] sm:$0xf]
    %v1646 = vld [vmem:[%s6 + $0x8] sm:$0xf]
    %v1647 = vld [vmem:[%s6 + $0xc] sm:$0xf]
    %v1648 = vld [vmem:[%s7] sm:$0x1]
    %v1650 = vperm.slane %v1648, 0
    %v1656 = vunpack.c.l.b16 %v1644
    %v1657 = vunpack.c.l.b16 %v1645
    %v1658 = vunpack.c.l.b16 %v1646
    %v1659 = vunpack.c.l.b16 %v1647
    %v1660 = vpack.c.b16 %v1657, %v1656
    %v1661 = vpack.c.b16 %v1659, %v1658
    %v1665 = vsel %vm47, %v1643, 0
    %1667 = vmatpush.bf16.msra.mxu0 0
    %1668 = vmatpush.bf16.msra.mxu0 0
    %1669 = vmatpush.bf16.msra.mxu0 0
    %1670 = vmatpush.bf16.msra.mxu0 0
    %1671 = vmatpush.bf16.msra.mxu0 0
    %1672 = vmatpush.bf16.msra.mxu0 0
    %1673 = vmatpush.bf16.msra.mxu0 %v1661
    %1674 = vmatpush.bf16.msra.mxu0 %v1660
    %1675 = vmatmul.bf16.gmra.mxu0 %v1665
    %v1676 = vpop.f32.mrf.mxu0
    %v1677 = vadd.f32 %v1650, %v1676
    %v1678 = vpop.f32.mrf.mxu0
    %v1679 = vadd.f32 %v1650, %v1678
    %1680 = vdwg.mxu0
    %v1681 = vmax.f32 %v1677, 0.0
    %v1682 = vmax.f32 %v1679, 0.0
    %v1683 = vpack.c.bf16 %v1682, %v1681
    %v1684 = vld [vmem:[%s8] sm:$0xf]
    %v1685 = vld [vmem:[%s8 + $0x4] sm:$0xf]
    %v1686 = vld [vmem:[%s8 + $0x8] sm:$0xf]
    %v1687 = vld [vmem:[%s8 + $0xc] sm:$0xf]
    %v1688 = vld [vmem:[%s8 + $0x10] sm:$0xf]
    %v1689 = vld [vmem:[%s8 + $0x14] sm:$0xf]
    %v1690 = vld [vmem:[%s8 + $0x18] sm:$0xf]
    %v1691 = vld [vmem:[%s8 + $0x1c] sm:$0xf]
    %v1692 = vld [vmem:[%s8 + $0x20] sm:$0xf]
    %v1693 = vld [vmem:[%s8 + $0x24] sm:$0xf]
    %v1694 = vld [vmem:[%s8 + $0x28] sm:$0xf]
    %v1695 = vld [vmem:[%s8 + $0x2c] sm:$0xf]
    %v1696 = vld [vmem:[%s8 + $0x30] sm:$0xf]
    %v1697 = vld [vmem:[%s8 + $0x34] sm:$0xf]
    %v1698 = vld [vmem:[%s8 + $0x38] sm:$0xf]
    %v1699 = vld [vmem:[%s8 + $0x3c] sm:$0xf]
    %v1700 = vld [vmem:[%s9] sm:$0x1]
    %v1702 = vperm.slane %v1700, 0
    %v1720 = vunpack.c.l.b16 %v1684
    %v1721 = vunpack.c.l.b16 %v1685
    %v1722 = vunpack.c.l.b16 %v1686
    %v1723 = vunpack.c.l.b16 %v1687
    %v1724 = vunpack.c.l.b16 %v1688
    %v1725 = vunpack.c.l.b16 %v1689
    %v1726 = vunpack.c.l.b16 %v1690
    %v1727 = vunpack.c.l.b16 %v1691
    %v1728 = vunpack.c.l.b16 %v1692
    %v1729 = vunpack.c.l.b16 %v1693
    %v1730 = vunpack.c.l.b16 %v1694
    %v1731 = vunpack.c.l.b16 %v1695
    %v1732 = vunpack.c.l.b16 %v1696
    %v1733 = vunpack.c.l.b16 %v1697
    %v1734 = vunpack.c.l.b16 %v1698
    %v1735 = vunpack.c.l.b16 %v1699
    %v1736 = vpack.c.b16 %v1721, %v1720
    %v1737 = vpack.c.b16 %v1723, %v1722
    %v1738 = vpack.c.b16 %v1725, %v1724
    %v1739 = vpack.c.b16 %v1727, %v1726
    %v1740 = vpack.c.b16 %v1729, %v1728
    %v1741 = vpack.c.b16 %v1731, %v1730
    %v1742 = vpack.c.b16 %v1733, %v1732
    %v1743 = vpack.c.b16 %v1735, %v1734
    %1752 = vmatpush.bf16.msra.mxu0 %v1743
    %1753 = vmatpush.bf16.msra.mxu0 %v1742
    %1754 = vmatpush.bf16.msra.mxu0 %v1741
    %1755 = vmatpush.bf16.msra.mxu0 %v1740
    %1756 = vmatpush.bf16.msra.mxu0 %v1739
    %1757 = vmatpush.bf16.msra.mxu0 %v1738
    %1758 = vmatpush.bf16.msra.mxu0 %v1737
    %1759 = vmatpush.bf16.msra.mxu0 %v1736
    %1760 = vmatmul.bf16.gmra.mxu0 %v1683
    %v1761 = vpop.f32.mrf.mxu0
    %v1762 = vadd.f32 %v1702, %v1761
    %v1763 = vpop.f32.mrf.mxu0
    %v1764 = vadd.f32 %v1702, %v1763
    %1765 = vdwg.mxu0
    %v1766 = vadd.f32 %v1585, %v1762
    %v1767 = vadd.f32 %v1586, %v1764
    %v1768 = vld [vmem:[%s10] sm:$0x1]
    %v1769 = vld [vmem:[%s11] sm:$0x1]
    %v1770 = vsel %vm47, %v1766, 0.0
    %1771 = vadd.xlane.f32.xlu0 %v1770
    %v1772 = vpop.xlane.xlu0 %1771
    %v1773 = vsel %vm47, %v1767, 0.0
    %1774 = vadd.xlane.f32.xlu0 %v1773
    %v1775 = vpop.xlane.xlu0 %1774
    %v1776 = vmul.f32 %v1772, %v60
    %v1777 = vmul.f32 %v1775, %v60
    %v1778 = vsub.f32 %v1766, %v1776
    %v1779 = vsub.f32 %v1767, %v1777
    %v1780 = vmul.f32 %v1778, %v1778
    %v1781 = vmul.f32 %v1779, %v1779
    %v1782 = vsel %vm47, %v1780, 0.0
    %1783 = vadd.xlane.f32.xlu0 %v1782
    %v1784 = vpop.xlane.xlu0 %1783
    %v1785 = vsel %vm47, %v1781, 0.0
    %1786 = vadd.xlane.f32.xlu0 %v1785
    %v1787 = vpop.xlane.xlu0 %1786
    %v1788 = vmul.f32 %v1784, %v60
    %v1789 = vmul.f32 %v1787, %v60
    %v1790 = vadd.f32 %v1788, 1e-05
    %v1791 = vadd.f32 %v1789, 1e-05
    %v1792 = vrsqrt.pop %v1790
    %v1793 = vmul.f32 %v1792, %v1790
    %v1794 = vmul.f32 %v1793, %v1792
    %v1795 = vmul.f32 0.5, %v1794
    %v1796 = vsub.f32 1.5, %v1795
    %v1797 = vmul.f32 %v1792, %v1796
    %vm1798 = vweird.f32 %v1790
    %vm1799 = vweird.f32 %v1792
    %vm1800 = vmor %vm1798, %vm1799
    %v1801 = vsel %vm1800, %v1792, %v1797
    %v1802 = vrsqrt.pop %v1791
    %v1803 = vmul.f32 %v1802, %v1791
    %v1804 = vmul.f32 %v1803, %v1802
    %v1805 = vmul.f32 0.5, %v1804
    %v1806 = vsub.f32 1.5, %v1805
    %v1807 = vmul.f32 %v1802, %v1806
    %vm1808 = vweird.f32 %v1791
    %vm1809 = vweird.f32 %v1802
    %vm1810 = vmor %vm1808, %vm1809
    %v1811 = vsel %vm1810, %v1802, %v1807
    %v1812 = vmul.f32 %v1778, %v1801
    %v1813 = vmul.f32 %v1779, %v1811
    %v1815 = vperm.slane %v1768, 0
    %v1817 = vmul.f32 %v1812, %v1815
    %v1818 = vmul.f32 %v1813, %v1815
    %v1820 = vperm.slane %v1769, 0
    %v1822 = vadd.f32 %v1817, %v1820
    %v1823 = vadd.f32 %v1818, %v1820
    %v1824 = vpack.c.bf16 %v1822, %v1822
    %v1825 = vpack.c.bf16 %v1823, %v1823
    %vm1826 = vcmask 257024
    %1827 = vst.msk [vmem:[#allocation3] sm:$0xf] %vm1826, %v1824
    %1828 = vst.msk [vmem:[#allocation3 + $0x4] sm:$0xf] %vm1826, %v1825
    // Predicated region
    $region50: #{tpu_custom_call.1} parent=1 // pred_check
      _
    $region51: #{tpu_custom_call.1} parent=1 // pred_check_branch
      %1830 = sbr.rel (0) target = $region53
    $region52: #{tpu_custom_call.1} parent=1 // pred_region
      %1832 = vsyncadd [#allocation4], 0
      %s1833 = sshll.u32 [#allocation3], 4
      %s1834 = int_to_ptr.vmem [resolvable:$true] %s1833
      %s1835 = sshll.u32 %s12, 4
      %s1836 = int_to_ptr.hbm [resolvable:$true] %s1835
      %1841 = dma.vmem_to_hbm [thread:$0]  %s1834, 128, %s1836, [#allocation4], 64, 64, 4
    $region53: #{tpu_custom_call.1} parent=1 // pred_fallthru
      _
    // Predicated region
    $region54: #{tpu_custom_call.1} parent=1 // pred_check
      _
    $region55: #{tpu_custom_call.1} parent=1 // pred_check_branch
      %1843 = sbr.rel (0) target = $region57
    $region56: #{tpu_custom_call.1} parent=1 // pred_region
      %1845 = dma.done [#allocation4], 128
    $region57: #{tpu_custom_call.1} parent=1 // pred_fallthru
      _
    %1846 = vsyncpa [#allocation4], 1

</llo_original>
